<compile_context>
chip_gen: v6e
topology: v6e:2x2x1
jax: 0.10.0
libtpu: 0.0.40
codegen_flags: <defaults>
</compile_context>

<pallas_src>
import functools
import math

import jax
import jax.numpy as jnp
from jax.experimental import pallas as pl
from jax.experimental.pallas import tpu as pltpu


def _round_up(x, m):
    return ((x + m - 1) // m) * m


def _pick_batch_block(batch, n_img, max_lanes=2048):
    """Largest divisor of `batch` whose lane footprint bb*n_img <= max_lanes."""
    bb = max(1, min(batch, max_lanes // max(n_img, 1)))
    while batch % bb:
        bb -= 1
    return bb


# --------------------------------------------------------------------------- #
# Fused kernel: all CNN layers for one block of `bb` batch elements.
# --------------------------------------------------------------------------- #
def _fused_cnn_kernel(*refs, num_layers, bb, height, width):
    # refs = (x_ref, mask_ref, w5_0, b_0, ..., w5_{L-1}, b_{L-1}, o_ref)
    x_ref, mask_ref = refs[0], refs[1]
    o_ref = refs[-1]
    wb_refs = refs[2:2 + 2 * num_layers]

    n_img = height * width
    n_tot = bb * n_img

    # Assemble (Cin_pad, bb*H*W): batch folded onto the lane axis.
    if bb == 1:
        x = x_ref[0, 0]
    else:
        x = jnp.concatenate([x_ref[0, j] for j in range(bb)], axis=1)

    masks = mask_ref[...]                       # (4, n_tot) f32 validity masks
    m_up = masks[0:1, :]
    m_down = masks[1:2, :]
    m_left = masks[2:3, :]
    m_right = masks[3:4, :]

    for li in range(num_layers):
        w_ref = wb_refs[2 * li]                 # (Cout, 5 * Cin)
        b_ref = wb_refs[2 * li + 1]             # (Cout, 1)

        # Shifted taps via XLU lane rotations; wrap-around across image/batch
        # boundaries is zeroed by the multiplicative masks.
        x_up = pltpu.roll(x, shift=width, axis=1) * m_up            # x[h-1, w]
        x_down = pltpu.roll(x, shift=n_tot - width, axis=1) * m_down  # x[h+1, w]
        x_left = pltpu.roll(x, shift=1, axis=1) * m_left             # x[h, w-1]
        x_right = pltpu.roll(x, shift=n_tot - 1, axis=1) * m_right   # x[h, w+1]

        # One wide-K MXU matmul instead of five small ones.
        x5 = jnp.concatenate([x, x_up, x_down, x_left, x_right], axis=0)
        y = jnp.dot(w_ref[...], x5, preferred_element_type=jnp.float32)
        y = y + b_ref[...]
        x = jnp.maximum(y, 0.0) if li < num_layers - 1 else y

    # Lane-dense stores (n_img multiple of 128), one per local batch element.
    for j in range(bb):
        o_ref[0, j] = x[:, j * n_img:(j + 1) * n_img].astype(o_ref.dtype)


# --------------------------------------------------------------------------- #
# Wrapper: packing + pallas_call
# --------------------------------------------------------------------------- #
def _pack_layer(w, b, cin_pad):
    """w: (Cout, Cin, 5) -> W5 (Cout, 5*cin_pad) with K-order [tap][channel];
    b: (Cout,) -> (Cout, 1). Tap order matches the kernel: c, up, down, l, r."""
    cout, cin, _ = w.shape
    if cin_pad != cin:
        w = jnp.pad(w, ((0, 0), (0, cin_pad - cin), (0, 0)))
    w5 = jnp.transpose(w, (0, 2, 1)).reshape(cout, 5 * cin_pad)
    return w5, b.reshape(cout, 1)


def _make_masks(height, width):
    """(4, H*W) f32 masks (up/down/left/right) that zero out-of-image taps."""
    n = height * width
    idx = jnp.arange(n, dtype=jnp.int32)
    row = idx // width
    col = idx % width
    m_up = row > 0
    m_down = row < height - 1
    m_left = col > 0
    m_right = col < width - 1
    return jnp.stack([m_up, m_down, m_left, m_right], axis=0).astype(jnp.float32)


def cnn_forward(x_nchw, params):
    """CNN.forward: CrossConv2d (+ ReLU for all but the last layer), fully fused."""
    B, cin, H, W = x_nchw.shape
    n_img = H * W
    num_layers = len(params)
    cin_pad = _round_up(cin, 8)

    bb = _pick_batch_block(B, n_img)         # batch elems folded onto lanes
    b_blocks = B // bb
    n_tot = bb * n_img

    # Free reshapes + channel pad: (B, Cin, H, W) -> (Bblk, bb, Cin_pad, H*W).
    x = x_nchw.reshape(B, cin, n_img)
    if cin_pad != cin:
        x = jnp.pad(x, ((0, 0), (0, cin_pad - cin), (0, 0)))
    x = x.reshape(b_blocks, bb, cin_pad, n_img)

    masks = jnp.tile(_make_masks(H, W), (1, bb))       # (4, bb*H*W)

    operands = [x, masks]
    in_specs = [
        pl.BlockSpec((1, bb, cin_pad, n_img), lambda i: (i, 0, 0, 0)),
        pl.BlockSpec((4, n_tot), lambda i: (0, 0)),    # masks: resident
    ]

    prev_cin = cin_pad
    for (w, b) in params:
        cout = w.shape[0]
        w5, b2 = _pack_layer(w, b, prev_cin)
        operands += [w5, b2]
        in_specs += [
            pl.BlockSpec((cout, 5 * prev_cin), lambda i: (0, 0)),  # weights: resident
            pl.BlockSpec((cout, 1), lambda i: (0, 0)),             # bias: resident
        ]
        prev_cin = cout
    cout_last = prev_cin

    kernel = functools.partial(
        _fused_cnn_kernel, num_layers=num_layers, bb=bb, height=H, width=W)

    out = pl.pallas_call(
        kernel,
        out_shape=jax.ShapeDtypeStruct((b_blocks, bb, cout_last, n_img),
                                       jnp.float32),
        grid_spec=pltpu.PrefetchScalarGridSpec(
            num_scalar_prefetch=0,
            grid=(b_blocks,),
            in_specs=in_specs,
            out_specs=pl.BlockSpec((1, bb, cout_last, n_img),
                                   lambda i: (i, 0, 0, 0)),
        ),
        compiler_params=pltpu.CompilerParams(
            dimension_semantics=("parallel",)),
    )(*operands)

    return out.reshape(B, cout_last, H, W)   # free reshape back to NCHW


# --------------------------------------------------------------------------- #
# Parameter init (matches CrossConv2d.__init__) and independent reference.
# --------------------------------------------------------------------------- #
def init_cnn_params(key, in_channels=6, hidden_channels=32, out_channels=6,
                    num_layers=4):
    """weight ~ randn(out, in, 5) / sqrt(in * 5), bias = 0."""
    dims = [in_channels] + [hidden_channels] * (num_layers - 1) + [out_channels]
    params = []
    for li in range(num_layers):
        cin, cout = dims[li], dims[li + 1]
        key, wkey = jax.random.split(key)
        w = jax.random.normal(wkey, (cout, cin, 5), dtype=jnp.float32)
        w = w / math.sqrt(cin * 5)
        b = jnp.zeros((cout,), dtype=jnp.float32)
        params.append((w, b))
    return params


def _reference_forward(x_nchw, params):
    """Reference via lax.conv with the expanded 3x3 cross kernel (NCHW, f32)."""
    x = x_nchw
    n_layers = len(params)
    for li, (w, b) in enumerate(params):
        cout, cin, _ = w.shape
        k = jnp.zeros((cout, cin, 3, 3), dtype=jnp.float32)
        k = k.at[:, :, 1, 1].set(w[:, :, 0])
        k = k.at[:, :, 0, 1].set(w[:, :, 1])
        k = k.at[:, :, 2, 1].set(w[:, :, 2])
        k = k.at[:, :, 1, 0].set(w[:, :, 3])
        k = k.at[:, :, 1, 2].set(w[:, :, 4])
        x = jax.lax.conv_general_dilated(
            x, k, window_strides=(1, 1), padding="SAME",
            dimension_numbers=("NCHW", "OIHW", "NCHW"),
            precision=jax.lax.Precision.HIGHEST)
        x = x + b.reshape(1, cout, 1, 1)
        if li < n_layers - 1:
            x = jnp.maximum(x, 0.0)
    return x


if __name__ == "__main__":
    key = jax.random.PRNGKey(0)
    key, xkey = jax.random.split(key)

    # Small shapes: batch=2, in_channels=6, hidden=32, out_channels=6, 16x16.
    B, Cin, H, W = 2, 6, 16, 16
    x = jax.random.normal(xkey, (B, Cin, H, W), dtype=jnp.float32)

    params = init_cnn_params(key, in_channels=Cin, hidden_channels=32,
                             out_channels=6, num_layers=4)

    out = jax.block_until_ready(cnn_forward(x, params))
    ref = jax.block_until_ready(_reference_forward(x, params))

    assert out.shape == ref.shape == (B, 6, H, W)
    assert jnp.allclose(out, ref, atol=2e-3, rtol=2e-3)

    print("KERNEL_OK")
</pallas_src>

<mosaic_0001>
module attributes {stable_mosaic.version = 11 : i64} {
  func.func @_fused_cnn_kernel(%arg0: i32, %arg1: memref<1x2x8x256xf32, #tpu.memory_space<vmem>>, %arg2: memref<4x512xf32, #tpu.memory_space<vmem>>, %arg3: memref<32x40xf32, #tpu.memory_space<vmem>>, %arg4: memref<32x1xf32, #tpu.memory_space<vmem>>, %arg5: memref<32x160xf32, #tpu.memory_space<vmem>>, %arg6: memref<32x1xf32, #tpu.memory_space<vmem>>, %arg7: memref<32x160xf32, #tpu.memory_space<vmem>>, %arg8: memref<32x1xf32, #tpu.memory_space<vmem>>, %arg9: memref<6x160xf32, #tpu.memory_space<vmem>>, %arg10: memref<6x1xf32, #tpu.memory_space<vmem>>, %arg11: memref<1x2x6x256xf32, #tpu.memory_space<vmem>>) attributes {dimension_semantics = [#tpu.dimension_semantics<parallel>], iteration_bounds = array<i64: 1>, scalar_prefetch = 0 : i64, scratch_operands = 0 : i64, tpu.core_type = #tpu.core_type<tc>, window_params = [{transform_indices = @transform_0, window_bounds = array<i64: 1, 2, 8, 256>}, {pipeline_mode = #tpu.pipeline_mode<synchronous>, transform_indices = @transform_1, window_bounds = array<i64: 4, 512>}, {pipeline_mode = #tpu.pipeline_mode<synchronous>, transform_indices = @transform_2, window_bounds = array<i64: 32, 40>}, {pipeline_mode = #tpu.pipeline_mode<synchronous>, transform_indices = @transform_3, window_bounds = array<i64: 32, 1>}, {pipeline_mode = #tpu.pipeline_mode<synchronous>, transform_indices = @transform_4, window_bounds = array<i64: 32, 160>}, {pipeline_mode = #tpu.pipeline_mode<synchronous>, transform_indices = @transform_5, window_bounds = array<i64: 32, 1>}, {pipeline_mode = #tpu.pipeline_mode<synchronous>, transform_indices = @transform_6, window_bounds = array<i64: 32, 160>}, {pipeline_mode = #tpu.pipeline_mode<synchronous>, transform_indices = @transform_7, window_bounds = array<i64: 32, 1>}, {pipeline_mode = #tpu.pipeline_mode<synchronous>, transform_indices = @transform_8, window_bounds = array<i64: 6, 160>}, {pipeline_mode = #tpu.pipeline_mode<synchronous>, transform_indices = @transform_9, window_bounds = array<i64: 6, 1>}, {transform_indices = @transform_10, window_bounds = array<i64: 1, 2, 6, 256>}]} {
    %c0 = arith.constant 0 : index
    %c0_0 = arith.constant 0 : index
    %c0_1 = arith.constant 0 : index
    %c0_2 = arith.constant 0 : index
    %0 = vector.load %arg1[%c0, %c0_0, %c0_1, %c0_2] : memref<1x2x8x256xf32, #tpu.memory_space<vmem>>, vector<1x1x8x256xf32>
    %1 = vector.shape_cast %0 : vector<1x1x8x256xf32> to vector<8x256xf32>
    %c0_3 = arith.constant 0 : index
    %c1 = arith.constant 1 : index
    %c0_4 = arith.constant 0 : index
    %c0_5 = arith.constant 0 : index
    %2 = vector.load %arg1[%c0_3, %c1, %c0_4, %c0_5] : memref<1x2x8x256xf32, #tpu.memory_space<vmem>>, vector<1x1x8x256xf32>
    %3 = vector.shape_cast %2 : vector<1x1x8x256xf32> to vector<8x256xf32>
    %4 = tpu.concatenate %1, %3 in 1 : vector<8x256xf32>, vector<8x256xf32> -> vector<8x512xf32>
    %c0_6 = arith.constant 0 : index
    %c0_7 = arith.constant 0 : index
    %5 = vector.load %arg2[%c0_6, %c0_7] : memref<4x512xf32, #tpu.memory_space<vmem>>, vector<4x512xf32>
    %6 = vector.extract_strided_slice %5 {offsets = [0, 0], sizes = [1, 512], strides = [1, 1]} : vector<4x512xf32> to vector<1x512xf32>
    %7 = vector.extract_strided_slice %5 {offsets = [1, 0], sizes = [1, 512], strides = [1, 1]} : vector<4x512xf32> to vector<1x512xf32>
    %8 = vector.extract_strided_slice %5 {offsets = [2, 0], sizes = [1, 512], strides = [1, 1]} : vector<4x512xf32> to vector<1x512xf32>
    %9 = vector.extract_strided_slice %5 {offsets = [3, 0], sizes = [1, 512], strides = [1, 1]} : vector<4x512xf32> to vector<1x512xf32>
    %c16_i32 = arith.constant 16 : i32
    %10 = tpu.dynamic_rotate %4 by %c16_i32 dim 1 : vector<8x512xf32>, i32 -> vector<8x512xf32>
    %11 = vector.broadcast %6 : vector<1x512xf32> to vector<8x512xf32>
    %12 = arith.mulf %10, %11 : vector<8x512xf32>
    %c496_i32 = arith.constant 496 : i32
    %13 = tpu.dynamic_rotate %4 by %c496_i32 dim 1 : vector<8x512xf32>, i32 -> vector<8x512xf32>
    %14 = vector.broadcast %7 : vector<1x512xf32> to vector<8x512xf32>
    %15 = arith.mulf %13, %14 : vector<8x512xf32>
    %c1_i32 = arith.constant 1 : i32
    %16 = tpu.dynamic_rotate %4 by %c1_i32 dim 1 : vector<8x512xf32>, i32 -> vector<8x512xf32>
    %17 = vector.broadcast %8 : vector<1x512xf32> to vector<8x512xf32>
    %18 = arith.mulf %16, %17 : vector<8x512xf32>
    %c511_i32 = arith.constant 511 : i32
    %19 = tpu.dynamic_rotate %4 by %c511_i32 dim 1 : vector<8x512xf32>, i32 -> vector<8x512xf32>
    %20 = vector.broadcast %9 : vector<1x512xf32> to vector<8x512xf32>
    %21 = arith.mulf %19, %20 : vector<8x512xf32>
    %22 = tpu.concatenate %4, %12, %15, %18, %21 in 0 : vector<8x512xf32>, vector<8x512xf32>, vector<8x512xf32>, vector<8x512xf32>, vector<8x512xf32> -> vector<40x512xf32>
    %c0_8 = arith.constant 0 : index
    %c0_9 = arith.constant 0 : index
    %23 = vector.load %arg3[%c0_8, %c0_9] : memref<32x40xf32, #tpu.memory_space<vmem>>, vector<32x40xf32>
    %cst = arith.constant dense<0.000000e+00> : vector<32x512xf32>
    %24 = tpu.matmul %23, %22, %cst {dimension_numbers = #tpu.dot_dimension_numbers<[1], [0], [0], [1], [0, 0, 1, 1], [], []>} : vector<32x40xf32>, vector<40x512xf32>, vector<32x512xf32> -> vector<32x512xf32>
    %c0_10 = arith.constant 0 : index
    %c0_11 = arith.constant 0 : index
    %25 = vector.load %arg4[%c0_10, %c0_11] : memref<32x1xf32, #tpu.memory_space<vmem>>, vector<32x1xf32>
    %26 = vector.broadcast %25 : vector<32x1xf32> to vector<32x512xf32>
    %27 = arith.addf %24, %26 : vector<32x512xf32>
    %cst_12 = arith.constant 0.000000e+00 : f32
    %28 = vector.broadcast %cst_12 : f32 to vector<32x512xf32>
    %29 = arith.maximumf %27, %28 : vector<32x512xf32>
    %c16_i32_13 = arith.constant 16 : i32
    %30 = tpu.dynamic_rotate %29 by %c16_i32_13 dim 1 : vector<32x512xf32>, i32 -> vector<32x512xf32>
    %31 = vector.broadcast %6 : vector<1x512xf32> to vector<32x512xf32>
    %32 = arith.mulf %30, %31 : vector<32x512xf32>
    %c496_i32_14 = arith.constant 496 : i32
    %33 = tpu.dynamic_rotate %29 by %c496_i32_14 dim 1 : vector<32x512xf32>, i32 -> vector<32x512xf32>
    %34 = vector.broadcast %7 : vector<1x512xf32> to vector<32x512xf32>
    %35 = arith.mulf %33, %34 : vector<32x512xf32>
    %c1_i32_15 = arith.constant 1 : i32
    %36 = tpu.dynamic_rotate %29 by %c1_i32_15 dim 1 : vector<32x512xf32>, i32 -> vector<32x512xf32>
    %37 = vector.broadcast %8 : vector<1x512xf32> to vector<32x512xf32>
    %38 = arith.mulf %36, %37 : vector<32x512xf32>
    %c511_i32_16 = arith.constant 511 : i32
    %39 = tpu.dynamic_rotate %29 by %c511_i32_16 dim 1 : vector<32x512xf32>, i32 -> vector<32x512xf32>
    %40 = vector.broadcast %9 : vector<1x512xf32> to vector<32x512xf32>
    %41 = arith.mulf %39, %40 : vector<32x512xf32>
    %42 = tpu.concatenate %29, %32, %35, %38, %41 in 0 : vector<32x512xf32>, vector<32x512xf32>, vector<32x512xf32>, vector<32x512xf32>, vector<32x512xf32> -> vector<160x512xf32>
    %c0_17 = arith.constant 0 : index
    %c0_18 = arith.constant 0 : index
    %43 = vector.load %arg5[%c0_17, %c0_18] : memref<32x160xf32, #tpu.memory_space<vmem>>, vector<32x160xf32>
    %cst_19 = arith.constant dense<0.000000e+00> : vector<32x512xf32>
    %44 = tpu.matmul %43, %42, %cst_19 {dimension_numbers = #tpu.dot_dimension_numbers<[1], [0], [0], [1], [0, 0, 1, 1], [], []>} : vector<32x160xf32>, vector<160x512xf32>, vector<32x512xf32> -> vector<32x512xf32>
    %c0_20 = arith.constant 0 : index
    %c0_21 = arith.constant 0 : index
    %45 = vector.load %arg6[%c0_20, %c0_21] : memref<32x1xf32, #tpu.memory_space<vmem>>, vector<32x1xf32>
    %46 = vector.broadcast %45 : vector<32x1xf32> to vector<32x512xf32>
    %47 = arith.addf %44, %46 : vector<32x512xf32>
    %cst_22 = arith.constant 0.000000e+00 : f32
    %48 = vector.broadcast %cst_22 : f32 to vector<32x512xf32>
    %49 = arith.maximumf %47, %48 : vector<32x512xf32>
    %c16_i32_23 = arith.constant 16 : i32
    %50 = tpu.dynamic_rotate %49 by %c16_i32_23 dim 1 : vector<32x512xf32>, i32 -> vector<32x512xf32>
    %51 = vector.broadcast %6 : vector<1x512xf32> to vector<32x512xf32>
    %52 = arith.mulf %50, %51 : vector<32x512xf32>
    %c496_i32_24 = arith.constant 496 : i32
    %53 = tpu.dynamic_rotate %49 by %c496_i32_24 dim 1 : vector<32x512xf32>, i32 -> vector<32x512xf32>
    %54 = vector.broadcast %7 : vector<1x512xf32> to vector<32x512xf32>
    %55 = arith.mulf %53, %54 : vector<32x512xf32>
    %c1_i32_25 = arith.constant 1 : i32
    %56 = tpu.dynamic_rotate %49 by %c1_i32_25 dim 1 : vector<32x512xf32>, i32 -> vector<32x512xf32>
    %57 = vector.broadcast %8 : vector<1x512xf32> to vector<32x512xf32>
    %58 = arith.mulf %56, %57 : vector<32x512xf32>
    %c511_i32_26 = arith.constant 511 : i32
    %59 = tpu.dynamic_rotate %49 by %c511_i32_26 dim 1 : vector<32x512xf32>, i32 -> vector<32x512xf32>
    %60 = vector.broadcast %9 : vector<1x512xf32> to vector<32x512xf32>
    %61 = arith.mulf %59, %60 : vector<32x512xf32>
    %62 = tpu.concatenate %49, %52, %55, %58, %61 in 0 : vector<32x512xf32>, vector<32x512xf32>, vector<32x512xf32>, vector<32x512xf32>, vector<32x512xf32> -> vector<160x512xf32>
    %c0_27 = arith.constant 0 : index
    %c0_28 = arith.constant 0 : index
    %63 = vector.load %arg7[%c0_27, %c0_28] : memref<32x160xf32, #tpu.memory_space<vmem>>, vector<32x160xf32>
    %cst_29 = arith.constant dense<0.000000e+00> : vector<32x512xf32>
    %64 = tpu.matmul %63, %62, %cst_29 {dimension_numbers = #tpu.dot_dimension_numbers<[1], [0], [0], [1], [0, 0, 1, 1], [], []>} : vector<32x160xf32>, vector<160x512xf32>, vector<32x512xf32> -> vector<32x512xf32>
    %c0_30 = arith.constant 0 : index
    %c0_31 = arith.constant 0 : index
    %65 = vector.load %arg8[%c0_30, %c0_31] : memref<32x1xf32, #tpu.memory_space<vmem>>, vector<32x1xf32>
    %66 = vector.broadcast %65 : vector<32x1xf32> to vector<32x512xf32>
    %67 = arith.addf %64, %66 : vector<32x512xf32>
    %cst_32 = arith.constant 0.000000e+00 : f32
    %68 = vector.broadcast %cst_32 : f32 to vector<32x512xf32>
    %69 = arith.maximumf %67, %68 : vector<32x512xf32>
    %c16_i32_33 = arith.constant 16 : i32
    %70 = tpu.dynamic_rotate %69 by %c16_i32_33 dim 1 : vector<32x512xf32>, i32 -> vector<32x512xf32>
    %71 = vector.broadcast %6 : vector<1x512xf32> to vector<32x512xf32>
    %72 = arith.mulf %70, %71 : vector<32x512xf32>
    %c496_i32_34 = arith.constant 496 : i32
    %73 = tpu.dynamic_rotate %69 by %c496_i32_34 dim 1 : vector<32x512xf32>, i32 -> vector<32x512xf32>
    %74 = vector.broadcast %7 : vector<1x512xf32> to vector<32x512xf32>
    %75 = arith.mulf %73, %74 : vector<32x512xf32>
    %c1_i32_35 = arith.constant 1 : i32
    %76 = tpu.dynamic_rotate %69 by %c1_i32_35 dim 1 : vector<32x512xf32>, i32 -> vector<32x512xf32>
    %77 = vector.broadcast %8 : vector<1x512xf32> to vector<32x512xf32>
    %78 = arith.mulf %76, %77 : vector<32x512xf32>
    %c511_i32_36 = arith.constant 511 : i32
    %79 = tpu.dynamic_rotate %69 by %c511_i32_36 dim 1 : vector<32x512xf32>, i32 -> vector<32x512xf32>
    %80 = vector.broadcast %9 : vector<1x512xf32> to vector<32x512xf32>
    %81 = arith.mulf %79, %80 : vector<32x512xf32>
    %82 = tpu.concatenate %69, %72, %75, %78, %81 in 0 : vector<32x512xf32>, vector<32x512xf32>, vector<32x512xf32>, vector<32x512xf32>, vector<32x512xf32> -> vector<160x512xf32>
    %c0_37 = arith.constant 0 : index
    %c0_38 = arith.constant 0 : index
    %83 = vector.load %arg9[%c0_37, %c0_38] : memref<6x160xf32, #tpu.memory_space<vmem>>, vector<6x160xf32>
    %cst_39 = arith.constant dense<0.000000e+00> : vector<6x512xf32>
    %84 = tpu.matmul %83, %82, %cst_39 {dimension_numbers = #tpu.dot_dimension_numbers<[1], [0], [0], [1], [0, 0, 1, 1], [], []>} : vector<6x160xf32>, vector<160x512xf32>, vector<6x512xf32> -> vector<6x512xf32>
    %c0_40 = arith.constant 0 : index
    %c0_41 = arith.constant 0 : index
    %85 = vector.load %arg10[%c0_40, %c0_41] : memref<6x1xf32, #tpu.memory_space<vmem>>, vector<6x1xf32>
    %86 = vector.broadcast %85 : vector<6x1xf32> to vector<6x512xf32>
    %87 = arith.addf %84, %86 : vector<6x512xf32>
    %88 = vector.extract_strided_slice %87 {offsets = [0, 0], sizes = [6, 256], strides = [1, 1]} : vector<6x512xf32> to vector<6x256xf32>
    %c0_42 = arith.constant 0 : index
    %c0_43 = arith.constant 0 : index
    %c0_44 = arith.constant 0 : index
    %c0_45 = arith.constant 0 : index
    %89 = vector.load %arg11[%c0_42, %c0_43, %c0_44, %c0_45] : memref<1x2x6x256xf32, #tpu.memory_space<vmem>>, vector<1x1x6x256xf32>
    %90 = vector.shape_cast %89 : vector<1x1x6x256xf32> to vector<6x256xf32>
    %91 = vector.shape_cast %88 : vector<6x256xf32> to vector<1x1x6x256xf32>
    tpu.vector_store %arg11[%c0_42, %c0_43, %c0_44, %c0_45], %91 {strides = array<i32>} : memref<1x2x6x256xf32, #tpu.memory_space<vmem>>, vector<1x1x6x256xf32>,
    %92 = vector.extract_strided_slice %87 {offsets = [0, 256], sizes = [6, 256], strides = [1, 1]} : vector<6x512xf32> to vector<6x256xf32>
    %c0_46 = arith.constant 0 : index
    %c1_47 = arith.constant 1 : index
    %c0_48 = arith.constant 0 : index
    %c0_49 = arith.constant 0 : index
    %93 = vector.load %arg11[%c0_46, %c1_47, %c0_48, %c0_49] : memref<1x2x6x256xf32, #tpu.memory_space<vmem>>, vector<1x1x6x256xf32>
    %94 = vector.shape_cast %93 : vector<1x1x6x256xf32> to vector<6x256xf32>
    %95 = vector.shape_cast %92 : vector<6x256xf32> to vector<1x1x6x256xf32>
    tpu.vector_store %arg11[%c0_46, %c1_47, %c0_48, %c0_49], %95 {strides = array<i32>} : memref<1x2x6x256xf32, #tpu.memory_space<vmem>>, vector<1x1x6x256xf32>,
    return
  }
  func.func @transform_0(%arg0: i32) -> (i32, i32, i32, i32) {
    %c0_i32 = arith.constant 0 : i32
    %c0_i32_0 = arith.constant 0 : i32
    %c0_i32_1 = arith.constant 0 : i32
    %c0_i32_2 = arith.constant 0 : i32
    return %arg0, %c0_i32, %c0_i32_0, %c0_i32_1 : i32, i32, i32, i32
  }
  func.func @transform_1(%arg0: i32) -> (i32, i32) {
    %c0_i32 = arith.constant 0 : i32
    %c0_i32_0 = arith.constant 0 : i32
    %c0_i32_1 = arith.constant 0 : i32
    return %c0_i32, %c0_i32_0 : i32, i32
  }
  func.func @transform_2(%arg0: i32) -> (i32, i32) {
    %c0_i32 = arith.constant 0 : i32
    %c0_i32_0 = arith.constant 0 : i32
    %c0_i32_1 = arith.constant 0 : i32
    return %c0_i32, %c0_i32_0 : i32, i32
  }
  func.func @transform_3(%arg0: i32) -> (i32, i32) {
    %c0_i32 = arith.constant 0 : i32
    %c0_i32_0 = arith.constant 0 : i32
    %c0_i32_1 = arith.constant 0 : i32
    return %c0_i32, %c0_i32_0 : i32, i32
  }
  func.func @transform_4(%arg0: i32) -> (i32, i32) {
    %c0_i32 = arith.constant 0 : i32
    %c0_i32_0 = arith.constant 0 : i32
    %c0_i32_1 = arith.constant 0 : i32
    return %c0_i32, %c0_i32_0 : i32, i32
  }
  func.func @transform_5(%arg0: i32) -> (i32, i32) {
    %c0_i32 = arith.constant 0 : i32
    %c0_i32_0 = arith.constant 0 : i32
    %c0_i32_1 = arith.constant 0 : i32
    return %c0_i32, %c0_i32_0 : i32, i32
  }
  func.func @transform_6(%arg0: i32) -> (i32, i32) {
    %c0_i32 = arith.constant 0 : i32
    %c0_i32_0 = arith.constant 0 : i32
    %c0_i32_1 = arith.constant 0 : i32
    return %c0_i32, %c0_i32_0 : i32, i32
  }
  func.func @transform_7(%arg0: i32) -> (i32, i32) {
    %c0_i32 = arith.constant 0 : i32
    %c0_i32_0 = arith.constant 0 : i32
    %c0_i32_1 = arith.constant 0 : i32
    return %c0_i32, %c0_i32_0 : i32, i32
  }
  func.func @transform_8(%arg0: i32) -> (i32, i32) {
    %c0_i32 = arith.constant 0 : i32
    %c0_i32_0 = arith.constant 0 : i32
    %c0_i32_1 = arith.constant 0 : i32
    return %c0_i32, %c0_i32_0 : i32, i32
  }
  func.func @transform_9(%arg0: i32) -> (i32, i32) {
    %c0_i32 = arith.constant 0 : i32
    %c0_i32_0 = arith.constant 0 : i32
    %c0_i32_1 = arith.constant 0 : i32
    return %c0_i32, %c0_i32_0 : i32, i32
  }
  func.func @transform_10(%arg0: i32) -> (i32, i32, i32, i32) {
    %c0_i32 = arith.constant 0 : i32
    %c0_i32_0 = arith.constant 0 : i32
    %c0_i32_1 = arith.constant 0 : i32
    %c0_i32_2 = arith.constant 0 : i32
    return %arg0, %c0_i32, %c0_i32_0, %c0_i32_1 : i32, i32, i32, i32
  }
}

</mosaic_0001>

<llo_original>
// kernel: tpu_custom_call.1
$region0: #{tpu_custom_call.1}
  #allocation0 [shape = 'u32[]', space=smem, size = 0x4, offset = 0x4, fixed_abs, tag = 'smem constant byte address 0x4 - core index']
  #allocation1 [shape = 'u32[144,128]{1,0:T(1,128)}', space=vmem, size = 0x12000, scoped, tag = 'internal scratch']
  %s0 = inlined_call_operand.vmem [shape: f32[1,2,8,256], index: 0, kind: input, shape index: {}]
  %s1 = inlined_call_operand.vmem [shape: f32[4,512], index: 1, kind: input, shape index: {}]
  %s2 = inlined_call_operand.hbm [shape: f32[32,40], index: 2, kind: input, shape index: {}]
  %s3 = inlined_call_operand.vmem [shape: f32[32,1], index: 3, kind: input, shape index: {}]
  %s4 = inlined_call_operand.vmem [shape: f32[32,160], index: 4, kind: input, shape index: {}]
  %s5 = inlined_call_operand.vmem [shape: f32[32,1], index: 5, kind: input, shape index: {}]
  %s6 = inlined_call_operand.hbm [shape: f32[32,160], index: 6, kind: input, shape index: {}]
  %s7 = inlined_call_operand.vmem [shape: f32[32,1], index: 7, kind: input, shape index: {}]
  %s8 = inlined_call_operand.hbm [shape: f32[6,160], index: 8, kind: input, shape index: {}]
  %s9 = inlined_call_operand.vmem [shape: f32[6,1], index: 9, kind: input, shape index: {}]
  %s10 = inlined_call_operand.vmem [shape: f32[1,2,6,256], index: 10, kind: output, shape index: {}]
  %s11 = sld [smem:[#allocation0]]
  $region62: #{tpu_custom_call.1} parent=0
    _
  %s13 = ssub.s32 1, %s11
  %s14 = scalar_select 0, %s13, %s11
  $region1: #{tpu_custom_call.1} parent=0
    #allocation2 [shape = 'u8[16384]{0}', space=vmem, size = 0x4000, scoped, tag = 'input window, operand 2, single buffered']
    #allocation3 [shape = 's32[1]{0}', space=sflag, size = 0x4, scoped, tag = 'scoped memory for tpu_custom_call.1']
    #allocation4 [shape = 'u8[32768]{0}', space=vmem, size = 0x8000, scoped, tag = 'input window, operand 6, single buffered']
    #allocation5 [shape = 's32[1]{0}', space=sflag, size = 0x4, scoped, tag = 'scoped memory for tpu_custom_call.1']
    #allocation6 [shape = 'u8[8192]{0}', space=vmem, size = 0x2000, scoped, tag = 'input window, operand 8, single buffered']
    %15 = vsyncpa [#allocation3], 0
    %16 = vsyncpa [#allocation5], 0
    // Predicated region
    $region2: #{tpu_custom_call.1} parent=1 // pred_check
      _
    $region3: #{tpu_custom_call.1} parent=1 // pred_check_branch
      %18 = sbr.rel (0) target = $region5
    $region4: #{tpu_custom_call.1} parent=1 // pred_region
      _
    $region5: #{tpu_custom_call.1} parent=1 // pred_fallthru
      _
    // Predicated region
    $region6: #{tpu_custom_call.1} parent=1 // pred_check
      _
    $region7: #{tpu_custom_call.1} parent=1 // pred_check_branch
      %20 = sbr.rel (0) target = $region9
    $region8: #{tpu_custom_call.1} parent=1 // pred_region
      _
    $region9: #{tpu_custom_call.1} parent=1 // pred_fallthru
      _
    // Predicated region
    $region10: #{tpu_custom_call.1} parent=1 // pred_check
      _
    $region11: #{tpu_custom_call.1} parent=1 // pred_check_branch
      %22 = sbr.rel (0) target = $region13
    $region12: #{tpu_custom_call.1} parent=1 // pred_region
      %s24 = ssub.s32 512, 512
      %25 = vsyncadd [#allocation3], %s24
      %s26 = sshll.u32 [#allocation2], 4
      %s27 = int_to_ptr.vmem [resolvable:$true] %s26
      %32 = dma.hbm_to_vmem [thread:$0]  %s2, 512, %s27, [#allocation3], 128, 128, 8
    $region13: #{tpu_custom_call.1} parent=1 // pred_fallthru
      _
    // Predicated region
    $region14: #{tpu_custom_call.1} parent=1 // pred_check
      _
    $region15: #{tpu_custom_call.1} parent=1 // pred_check_branch
      %34 = sbr.rel (0) target = $region17
    $region16: #{tpu_custom_call.1} parent=1 // pred_region
      _
    $region17: #{tpu_custom_call.1} parent=1 // pred_fallthru
      _
    // Predicated region
    $region18: #{tpu_custom_call.1} parent=1 // pred_check
      _
    $region19: #{tpu_custom_call.1} parent=1 // pred_check_branch
      %36 = sbr.rel (0) target = $region21
    $region20: #{tpu_custom_call.1} parent=1 // pred_region
      _
    $region21: #{tpu_custom_call.1} parent=1 // pred_fallthru
      _
    // Predicated region
    $region22: #{tpu_custom_call.1} parent=1 // pred_check
      _
    $region23: #{tpu_custom_call.1} parent=1 // pred_check_branch
      %38 = sbr.rel (0) target = $region25
    $region24: #{tpu_custom_call.1} parent=1 // pred_region
      _
    $region25: #{tpu_custom_call.1} parent=1 // pred_fallthru
      _
    // Predicated region
    $region26: #{tpu_custom_call.1} parent=1 // pred_check
      _
    $region27: #{tpu_custom_call.1} parent=1 // pred_check_branch
      %40 = sbr.rel (0) target = $region29
    $region28: #{tpu_custom_call.1} parent=1 // pred_region
      %s42 = ssub.s32 1024, 1024
      %43 = vsyncadd [#allocation5], %s42
      %s44 = sshll.u32 [#allocation4], 4
      %s45 = int_to_ptr.vmem [resolvable:$true] %s44
      %50 = dma.hbm_to_vmem [thread:$0]  %s6, 1024, %s45, [#allocation5], 256, 256, 16
    $region29: #{tpu_custom_call.1} parent=1 // pred_fallthru
      _
    // Predicated region
    $region30: #{tpu_custom_call.1} parent=1 // pred_check
      _
    $region31: #{tpu_custom_call.1} parent=1 // pred_check_branch
      %52 = sbr.rel (0) target = $region33
    $region32: #{tpu_custom_call.1} parent=1 // pred_region
      _
    $region33: #{tpu_custom_call.1} parent=1 // pred_fallthru
      _
    // Predicated region
    $region34: #{tpu_custom_call.1} parent=1 // pred_check
      _
    $region35: #{tpu_custom_call.1} parent=1 // pred_check_branch
      %54 = sbr.rel (0) target = $region37
    $region36: #{tpu_custom_call.1} parent=1 // pred_region
      %s56 = ssub.s32 256, 256
      %57 = vsyncadd [#allocation5], %s56
      %s59 = sshll.u32 [#allocation6], 4
      %s60 = int_to_ptr.vmem [resolvable:$true] %s59
      %62 = dma.hbm_to_vmem [thread:$0]  %s8, 256, %s60, [#allocation5]
    $region37: #{tpu_custom_call.1} parent=1 // pred_fallthru
      _
    // Predicated region
    $region38: #{tpu_custom_call.1} parent=1 // pred_check
      _
    $region39: #{tpu_custom_call.1} parent=1 // pred_check_branch
      %64 = sbr.rel (0) target = $region41
    $region40: #{tpu_custom_call.1} parent=1 // pred_region
      _
    $region41: #{tpu_custom_call.1} parent=1 // pred_fallthru
      _
    // Predicated region
    $region42: #{tpu_custom_call.1} parent=1 // pred_check
      _
    $region43: #{tpu_custom_call.1} parent=1 // pred_check_branch
      %66 = sbr.rel (0) target = $region45
    $region44: #{tpu_custom_call.1} parent=1 // pred_region
      %67 = dma.done [#allocation3], 512
    $region45: #{tpu_custom_call.1} parent=1 // pred_fallthru
      _
    // Predicated region
    $region46: #{tpu_custom_call.1} parent=1 // pred_check
      _
    $region47: #{tpu_custom_call.1} parent=1 // pred_check_branch
      %69 = sbr.rel (0) target = $region49
    $region48: #{tpu_custom_call.1} parent=1 // pred_region
      %70 = dma.done [#allocation5], 1024
    $region49: #{tpu_custom_call.1} parent=1 // pred_fallthru
      _
    // Predicated region
    $region50: #{tpu_custom_call.1} parent=1 // pred_check
      _
    $region51: #{tpu_custom_call.1} parent=1 // pred_check_branch
      %72 = sbr.rel (0) target = $region53
    $region52: #{tpu_custom_call.1} parent=1 // pred_region
      %73 = dma.done [#allocation5], 256
    $region53: #{tpu_custom_call.1} parent=1 // pred_fallthru
      _
    %v74 = vld [vmem:[%s0] sm:$0xff]
    %v75 = vld [vmem:[%s0 + $0x8] sm:$0xff]
    %s76 = scalar_lea.vmem %s0, 16
    %v77 = vld [vmem:[%s76] sm:$0xff]
    %v78 = vld [vmem:[%s76 + $0x8] sm:$0xff]
    %v79 = vld [vmem:[%s1] sm:$0xff]
    %v80 = vld [vmem:[%s1 + $0x8] sm:$0xff]
    %81 = vrot.lane.b32.xlu0 %v74, 16
    %v82 = vpop.permute.xlu0 %81
    %83 = vrot.lane.b32.xlu0 %v75, 16
    %v84 = vpop.permute.xlu0 %83
    %85 = vrot.lane.b32.xlu0 %v77, 16
    %v86 = vpop.permute.xlu0 %85
    %87 = vrot.lane.b32.xlu0 %v78, 16
    %v88 = vpop.permute.xlu0 %87
    %v89 = vlaneseq
    %v90 = vand.u32 %v89, 127
    %vm91 = vcmp.lt.s32.totalorder %v90, 16
    %v92 = vsel %vm91, %v86, %v88
    %v93 = vsel %vm91, %v84, %v86
    %v94 = vsel %vm91, %v82, %v84
    %v95 = vsel %vm91, %v88, %v82
    %v98 = vlaneseq
    %v99 = vshrl.u32 %v98, 7
    %v100 = vsub.s32 0, %v99
    %v101 = vrot.slane %v79, %v100
    %v102 = vlaneseq
    %v103 = vshrl.u32 %v102, 7
    %v104 = vsub.s32 4, %v103
    %v105 = vrot.slane %v79, %v104
    %v106 = vlaneseq
    %v107 = vshrl.u32 %v106, 7
    %v108 = vsub.s32 0, %v107
    %v109 = vrot.slane %v80, %v108
    %v110 = vlaneseq
    %v111 = vshrl.u32 %v110, 7
    %v112 = vsub.s32 4, %v111
    %v113 = vrot.slane %v80, %v112
    %v118 = vlaneseq
    %v119 = vshrl.u32 %v118, 7
    %v120 = vsub.s32 0, %v119
    %v121 = vrot.slane %v101, %v120
    %v122 = vlaneseq
    %v123 = vshrl.u32 %v122, 7
    %v124 = vsub.s32 0, %v123
    %v125 = vrot.slane %v105, %v124
    %v126 = vlaneseq
    %v127 = vshrl.u32 %v126, 7
    %v128 = vsub.s32 0, %v127
    %v129 = vrot.slane %v109, %v128
    %v130 = vlaneseq
    %v131 = vshrl.u32 %v130, 7
    %v132 = vsub.s32 0, %v131
    %v133 = vrot.slane %v113, %v132
    %v134 = vmul.f32 %v95, %v121
    %v135 = vmul.f32 %v94, %v125
    %v136 = vmul.f32 %v93, %v129
    %v137 = vmul.f32 %v92, %v133
    %138 = vrot.lane.b32.xlu0 %v74, 112
    %v139 = vpop.permute.xlu0 %138
    %140 = vrot.lane.b32.xlu0 %v75, 112
    %v141 = vpop.permute.xlu0 %140
    %142 = vrot.lane.b32.xlu0 %v77, 112
    %v143 = vpop.permute.xlu0 %142
    %144 = vrot.lane.b32.xlu0 %v78, 112
    %v145 = vpop.permute.xlu0 %144
    %vm146 = vcmp.lt.s32.totalorder %v90, 112
    %v147 = vsel %vm146, %v143, %v145
    %v148 = vsel %vm146, %v141, %v143
    %v149 = vsel %vm146, %v139, %v141
    %v150 = vsel %vm146, %v145, %v139
    %v151 = vlaneseq
    %v152 = vshrl.u32 %v151, 7
    %v153 = vsub.s32 1, %v152
    %v154 = vrot.slane %v79, %v153
    %v155 = vlaneseq
    %v156 = vshrl.u32 %v155, 7
    %v157 = vsub.s32 5, %v156
    %v158 = vrot.slane %v79, %v157
    %v159 = vlaneseq
    %v160 = vshrl.u32 %v159, 7
    %v161 = vsub.s32 1, %v160
    %v162 = vrot.slane %v80, %v161
    %v163 = vlaneseq
    %v164 = vshrl.u32 %v163, 7
    %v165 = vsub.s32 5, %v164
    %v166 = vrot.slane %v80, %v165
    %v171 = vlaneseq
    %v172 = vshrl.u32 %v171, 7
    %v173 = vsub.s32 1, %v172
    %v174 = vrot.slane %v154, %v173
    %v175 = vlaneseq
    %v176 = vshrl.u32 %v175, 7
    %v177 = vsub.s32 1, %v176
    %v178 = vrot.slane %v158, %v177
    %v179 = vlaneseq
    %v180 = vshrl.u32 %v179, 7
    %v181 = vsub.s32 1, %v180
    %v182 = vrot.slane %v162, %v181
    %v183 = vlaneseq
    %v184 = vshrl.u32 %v183, 7
    %v185 = vsub.s32 1, %v184
    %v186 = vrot.slane %v166, %v185
    %v187 = vmul.f32 %v149, %v174
    %v188 = vmul.f32 %v148, %v178
    %v189 = vmul.f32 %v147, %v182
    %v190 = vmul.f32 %v150, %v186
    %191 = vrot.lane.b32.xlu0 %v74, 1
    %v192 = vpop.permute.xlu0 %191
    %193 = vrot.lane.b32.xlu0 %v75, 1
    %v194 = vpop.permute.xlu0 %193
    %195 = vrot.lane.b32.xlu0 %v77, 1
    %v196 = vpop.permute.xlu0 %195
    %197 = vrot.lane.b32.xlu0 %v78, 1
    %v198 = vpop.permute.xlu0 %197
    %vm199 = vcmp.lt.s32.totalorder %v90, 1
    %v200 = vsel %vm199, %v196, %v198
    %v201 = vsel %vm199, %v194, %v196
    %v202 = vsel %vm199, %v192, %v194
    %v203 = vsel %vm199, %v198, %v192
    %v204 = vlaneseq
    %v205 = vshrl.u32 %v204, 7
    %v206 = vsub.s32 2, %v205
    %v207 = vrot.slane %v79, %v206
    %v208 = vlaneseq
    %v209 = vshrl.u32 %v208, 7
    %v210 = vsub.s32 6, %v209
    %v211 = vrot.slane %v79, %v210
    %v212 = vlaneseq
    %v213 = vshrl.u32 %v212, 7
    %v214 = vsub.s32 2, %v213
    %v215 = vrot.slane %v80, %v214
    %v216 = vlaneseq
    %v217 = vshrl.u32 %v216, 7
    %v218 = vsub.s32 6, %v217
    %v219 = vrot.slane %v80, %v218
    %v224 = vlaneseq
    %v225 = vshrl.u32 %v224, 7
    %v226 = vsub.s32 2, %v225
    %v227 = vrot.slane %v207, %v226
    %v228 = vlaneseq
    %v229 = vshrl.u32 %v228, 7
    %v230 = vsub.s32 2, %v229
    %v231 = vrot.slane %v211, %v230
    %v232 = vlaneseq
    %v233 = vshrl.u32 %v232, 7
    %v234 = vsub.s32 2, %v233
    %v235 = vrot.slane %v215, %v234
    %v236 = vlaneseq
    %v237 = vshrl.u32 %v236, 7
    %v238 = vsub.s32 2, %v237
    %v239 = vrot.slane %v219, %v238
    %v240 = vmul.f32 %v203, %v227
    %v241 = vmul.f32 %v202, %v231
    %v242 = vmul.f32 %v201, %v235
    %v243 = vmul.f32 %v200, %v239
    %244 = vrot.lane.b32.xlu0 %v74, 127
    %v245 = vpop.permute.xlu0 %244
    %246 = vrot.lane.b32.xlu0 %v75, 127
    %v247 = vpop.permute.xlu0 %246
    %248 = vrot.lane.b32.xlu0 %v77, 127
    %v249 = vpop.permute.xlu0 %248
    %250 = vrot.lane.b32.xlu0 %v78, 127
    %v251 = vpop.permute.xlu0 %250
    %vm252 = vcmp.lt.s32.totalorder %v90, 127
    %v253 = vsel %vm252, %v249, %v251
    %v254 = vsel %vm252, %v247, %v249
    %v255 = vsel %vm252, %v245, %v247
    %v256 = vsel %vm252, %v251, %v245
    %v257 = vlaneseq
    %v258 = vshrl.u32 %v257, 7
    %v259 = vsub.s32 3, %v258
    %v260 = vrot.slane %v79, %v259
    %v261 = vlaneseq
    %v262 = vshrl.u32 %v261, 7
    %v263 = vsub.s32 7, %v262
    %v264 = vrot.slane %v79, %v263
    %v265 = vlaneseq
    %v266 = vshrl.u32 %v265, 7
    %v267 = vsub.s32 3, %v266
    %v268 = vrot.slane %v80, %v267
    %v269 = vlaneseq
    %v270 = vshrl.u32 %v269, 7
    %v271 = vsub.s32 7, %v270
    %v272 = vrot.slane %v80, %v271
    %v277 = vlaneseq
    %v278 = vshrl.u32 %v277, 7
    %v279 = vsub.s32 3, %v278
    %v280 = vrot.slane %v260, %v279
    %v281 = vlaneseq
    %v282 = vshrl.u32 %v281, 7
    %v283 = vsub.s32 3, %v282
    %v284 = vrot.slane %v264, %v283
    %v285 = vlaneseq
    %v286 = vshrl.u32 %v285, 7
    %v287 = vsub.s32 3, %v286
    %v288 = vrot.slane %v268, %v287
    %v289 = vlaneseq
    %v290 = vshrl.u32 %v289, 7
    %v291 = vsub.s32 3, %v290
    %v292 = vrot.slane %v272, %v291
    %v293 = vmul.f32 %v255, %v280
    %v294 = vmul.f32 %v254, %v284
    %v295 = vmul.f32 %v253, %v288
    %v296 = vmul.f32 %v256, %v292
    %v297 = vld [vmem:[#allocation2] sm:$0xff]
    %v298 = vld [vmem:[#allocation2 + $0x8] sm:$0xff]
    %v299 = vld [vmem:[#allocation2 + $0x10] sm:$0xff]
    %v300 = vld [vmem:[#allocation2 + $0x18] sm:$0xff]
    %v301 = vld [vmem:[%s3] sm:$0xff]
    %v302 = vld [vmem:[%s3 + $0x8] sm:$0xff]
    %v303 = vld [vmem:[%s3 + $0x10] sm:$0xff]
    %v304 = vld [vmem:[%s3 + $0x18] sm:$0xff]
    %306 = vset.pattern.permute.xlu0 0
    %307 = vperm.xlu0 %306, %v301
    %v308 = vpop.permute.xlu0 %307
    %311 = vset.pattern.permute.xlu0 0
    %312 = vperm.xlu0 %311, %v302
    %v313 = vpop.permute.xlu0 %312
    %316 = vset.pattern.permute.xlu0 0
    %317 = vperm.xlu0 %316, %v303
    %v318 = vpop.permute.xlu0 %317
    %321 = vset.pattern.permute.xlu0 0
    %322 = vperm.xlu0 %321, %v304
    %v323 = vpop.permute.xlu0 %322
    %vm325 = vcmask 326656
    %v327 = vsel %vm325, %v297, 0
    %v330 = vsel %vm325, %v298, 0
    %v333 = vsel %vm325, %v299, 0
    %v336 = vsel %vm325, %v300, 0
    %338 = vmatprep.subr.mxu0 0.0
    %339 = vmatpush1.msra.mxu0 0.0
    %340 = vmatprep.subr.mxu0 0.0
    %341 = vmatpush1.msra.mxu0 0.0
    %342 = vmatprep.subr.mxu0 0.0
    %343 = vmatpush1.msra.mxu0 0.0
    %344 = vmatprep.subr.mxu0 0.0
    %345 = vmatpush1.msra.mxu0 0.0
    %346 = vmatprep.subr.mxu0 0.0
    %347 = vmatpush1.msra.mxu0 0.0
    %348 = vmatprep.subr.mxu0 0.0
    %349 = vmatpush1.msra.mxu0 0.0
    %350 = vmatprep.subr.mxu0 0.0
    %351 = vmatpush1.msra.mxu0 0.0
    %352 = vmatprep.subr.mxu0 0.0
    %353 = vmatpush1.msra.mxu0 0.0
    %354 = vmatprep.subr.mxu0 0.0
    %355 = vmatpush1.msra.mxu0 0.0
    %356 = vmatprep.subr.mxu0 0.0
    %357 = vmatpush1.msra.mxu0 0.0
    %358 = vmatprep.subr.mxu0 0.0
    %359 = vmatpush1.msra.mxu0 0.0
    %360 = vmatprep.subr.mxu0 %v294
    %361 = vmatpush1.msra.mxu0 %v293
    %362 = vmatprep.subr.mxu0 %v241
    %363 = vmatpush1.msra.mxu0 %v240
    %364 = vmatprep.subr.mxu0 %v188
    %365 = vmatpush1.msra.mxu0 %v187
    %366 = vmatprep.subr.mxu0 %v135
    %367 = vmatpush1.msra.mxu0 %v134
    %368 = vmatprep.subr.mxu0 %v75
    %369 = vmatpush1.msra.mxu0 %v74
    %370 = vmatprep.subr.mxu0 0.0
    %371 = vmatpush2.msra.mxu0 0.0
    %372 = vmatprep.subr.mxu0 0.0
    %373 = vmatpush2.msra.mxu0 0.0
    %374 = vmatprep.subr.mxu0 0.0
    %375 = vmatpush2.msra.mxu0 0.0
    %376 = vmatprep.subr.mxu0 0.0
    %377 = vmatpush2.msra.mxu0 0.0
    %378 = vmatprep.subr.mxu0 0.0
    %379 = vmatpush2.msra.mxu0 0.0
    %380 = vmatprep.subr.mxu0 0.0
    %381 = vmatpush2.msra.mxu0 0.0
    %382 = vmatprep.subr.mxu0 0.0
    %383 = vmatpush2.msra.mxu0 0.0
    %384 = vmatprep.subr.mxu0 0.0
    %385 = vmatpush2.msra.mxu0 0.0
    %386 = vmatprep.subr.mxu0 0.0
    %387 = vmatpush2.msra.mxu0 0.0
    %388 = vmatprep.subr.mxu0 0.0
    %389 = vmatpush2.msra.mxu0 0.0
    %390 = vmatprep.subr.mxu0 0.0
    %391 = vmatpush2.msra.mxu0 0.0
    %392 = vmatprep.subr.mxu0 0.0
    %393 = vmatpush2.msra.mxu0 0.0
    %394 = vmatprep.subr.mxu0 0.0
    %395 = vmatpush2.msra.mxu0 0.0
    %396 = vmatprep.subr.mxu0 0.0
    %397 = vmatpush2.msra.mxu0 0.0
    %398 = vmatprep.subr.mxu0 0.0
    %399 = vmatpush2.msra.mxu0 0.0
    %400 = vmatprep.subr.mxu0 0.0
    %401 = vmatpush2.msra.mxu0 0.0
    %402 = vmatprep.mubr.f32.mxu0 0.0
    %403 = vmatmul.mubr.f32.gmra.mxu0 %v327
    %v404 = vpop.f32.mrf.mxu0
    %v405 = vadd.f32 %v308, %v404
    %v406 = vpop.f32.mrf.mxu0
    %v407 = vadd.f32 %v308, %v406
    %408 = vmatprep.mubr.f32.mxu0 0.0
    %409 = vmatmul.mubr.f32.gmra.mxu0 %v330
    %v410 = vpop.f32.mrf.mxu0
    %v411 = vadd.f32 %v313, %v410
    %v412 = vpop.f32.mrf.mxu0
    %v413 = vadd.f32 %v313, %v412
    %414 = vmatprep.mubr.f32.mxu0 0.0
    %415 = vmatmul.mubr.f32.gmra.mxu0 %v333
    %v416 = vpop.f32.mrf.mxu0
    %v417 = vadd.f32 %v318, %v416
    %v418 = vpop.f32.mrf.mxu0
    %v419 = vadd.f32 %v318, %v418
    %420 = vmatprep.mubr.f32.mxu0 0.0
    %421 = vmatmul.mubr.f32.gmra.mxu0 %v336
    %v422 = vpop.f32.mrf.mxu0
    %v423 = vadd.f32 %v323, %v422
    %v424 = vpop.f32.mrf.mxu0
    %v425 = vadd.f32 %v323, %v424
    %426 = vdwg.mxu0
    %427 = vmatprep.subr.mxu0 0.0
    %428 = vmatpush1.msra.mxu0 0.0
    %429 = vmatprep.subr.mxu0 0.0
    %430 = vmatpush1.msra.mxu0 0.0
    %431 = vmatprep.subr.mxu0 0.0
    %432 = vmatpush1.msra.mxu0 0.0
    %433 = vmatprep.subr.mxu0 0.0
    %434 = vmatpush1.msra.mxu0 0.0
    %435 = vmatprep.subr.mxu0 0.0
    %436 = vmatpush1.msra.mxu0 0.0
    %437 = vmatprep.subr.mxu0 0.0
    %438 = vmatpush1.msra.mxu0 0.0
    %439 = vmatprep.subr.mxu0 0.0
    %440 = vmatpush1.msra.mxu0 0.0
    %441 = vmatprep.subr.mxu0 0.0
    %442 = vmatpush1.msra.mxu0 0.0
    %443 = vmatprep.subr.mxu0 0.0
    %444 = vmatpush1.msra.mxu0 0.0
    %445 = vmatprep.subr.mxu0 0.0
    %446 = vmatpush1.msra.mxu0 0.0
    %447 = vmatprep.subr.mxu0 0.0
    %448 = vmatpush1.msra.mxu0 0.0
    %449 = vmatprep.subr.mxu0 %v296
    %450 = vmatpush1.msra.mxu0 %v295
    %451 = vmatprep.subr.mxu0 %v243
    %452 = vmatpush1.msra.mxu0 %v242
    %453 = vmatprep.subr.mxu0 %v190
    %454 = vmatpush1.msra.mxu0 %v189
    %455 = vmatprep.subr.mxu0 %v137
    %456 = vmatpush1.msra.mxu0 %v136
    %457 = vmatprep.subr.mxu0 %v78
    %458 = vmatpush1.msra.mxu0 %v77
    %459 = vmatprep.subr.mxu0 0.0
    %460 = vmatpush2.msra.mxu0 0.0
    %461 = vmatprep.subr.mxu0 0.0
    %462 = vmatpush2.msra.mxu0 0.0
    %463 = vmatprep.subr.mxu0 0.0
    %464 = vmatpush2.msra.mxu0 0.0
    %465 = vmatprep.subr.mxu0 0.0
    %466 = vmatpush2.msra.mxu0 0.0
    %467 = vmatprep.subr.mxu0 0.0
    %468 = vmatpush2.msra.mxu0 0.0
    %469 = vmatprep.subr.mxu0 0.0
    %470 = vmatpush2.msra.mxu0 0.0
    %471 = vmatprep.subr.mxu0 0.0
    %472 = vmatpush2.msra.mxu0 0.0
    %473 = vmatprep.subr.mxu0 0.0
    %474 = vmatpush2.msra.mxu0 0.0
    %475 = vmatprep.subr.mxu0 0.0
    %476 = vmatpush2.msra.mxu0 0.0
    %477 = vmatprep.subr.mxu0 0.0
    %478 = vmatpush2.msra.mxu0 0.0
    %479 = vmatprep.subr.mxu0 0.0
    %480 = vmatpush2.msra.mxu0 0.0
    %481 = vmatprep.subr.mxu0 0.0
    %482 = vmatpush2.msra.mxu0 0.0
    %483 = vmatprep.subr.mxu0 0.0
    %484 = vmatpush2.msra.mxu0 0.0
    %485 = vmatprep.subr.mxu0 0.0
    %486 = vmatpush2.msra.mxu0 0.0
    %487 = vmatprep.subr.mxu0 0.0
    %488 = vmatpush2.msra.mxu0 0.0
    %489 = vmatprep.subr.mxu0 0.0
    %490 = vmatpush2.msra.mxu0 0.0
    %491 = vmatprep.mubr.f32.mxu0 0.0
    %492 = vmatmul.mubr.f32.gmra.mxu0 %v327
    %v493 = vpop.f32.mrf.mxu0
    %v494 = vadd.f32 %v308, %v493
    %v495 = vpop.f32.mrf.mxu0
    %v496 = vadd.f32 %v308, %v495
    %497 = vmatprep.mubr.f32.mxu0 0.0
    %498 = vmatmul.mubr.f32.gmra.mxu0 %v330
    %v499 = vpop.f32.mrf.mxu0
    %v500 = vadd.f32 %v313, %v499
    %v501 = vpop.f32.mrf.mxu0
    %v502 = vadd.f32 %v313, %v501
    %503 = vmatprep.mubr.f32.mxu0 0.0
    %504 = vmatmul.mubr.f32.gmra.mxu0 %v333
    %v505 = vpop.f32.mrf.mxu0
    %v506 = vadd.f32 %v318, %v505
    %v507 = vpop.f32.mrf.mxu0
    %v508 = vadd.f32 %v318, %v507
    %509 = vmatprep.mubr.f32.mxu0 0.0
    %510 = vmatmul.mubr.f32.gmra.mxu0 %v336
    %v511 = vpop.f32.mrf.mxu0
    %v512 = vadd.f32 %v323, %v511
    %v513 = vpop.f32.mrf.mxu0
    %v514 = vadd.f32 %v323, %v513
    %515 = vdwg.mxu0
    %v516 = vmax.f32 %v405, 0.0
    %v517 = vmax.f32 %v407, 0.0
    %v518 = vmax.f32 %v494, 0.0
    %v519 = vmax.f32 %v496, 0.0
    %v520 = vmax.f32 %v411, 0.0
    %v521 = vmax.f32 %v413, 0.0
    %v522 = vmax.f32 %v500, 0.0
    %v523 = vmax.f32 %v502, 0.0
    %v524 = vmax.f32 %v417, 0.0
    %v525 = vmax.f32 %v419, 0.0
    %v526 = vmax.f32 %v506, 0.0
    %v527 = vmax.f32 %v508, 0.0
    %v528 = vmax.f32 %v423, 0.0
    %v529 = vmax.f32 %v425, 0.0
    %v530 = vmax.f32 %v512, 0.0
    %v531 = vmax.f32 %v514, 0.0
    %532 = vrot.lane.b32.xlu0 %v516, 16
    %v533 = vpop.permute.xlu0 %532
    %534 = vrot.lane.b32.xlu0 %v520, 16
    %v535 = vpop.permute.xlu0 %534
    %536 = vrot.lane.b32.xlu0 %v524, 16
    %v537 = vpop.permute.xlu0 %536
    %538 = vrot.lane.b32.xlu0 %v528, 16
    %v539 = vpop.permute.xlu0 %538
    %540 = vrot.lane.b32.xlu0 %v517, 16
    %v541 = vpop.permute.xlu0 %540
    %542 = vrot.lane.b32.xlu0 %v521, 16
    %v543 = vpop.permute.xlu0 %542
    %544 = vrot.lane.b32.xlu0 %v525, 16
    %v545 = vpop.permute.xlu0 %544
    %546 = vrot.lane.b32.xlu0 %v529, 16
    %v547 = vpop.permute.xlu0 %546
    %548 = vrot.lane.b32.xlu0 %v518, 16
    %v549 = vpop.permute.xlu0 %548
    %550 = vrot.lane.b32.xlu0 %v522, 16
    %v551 = vpop.permute.xlu0 %550
    %552 = vrot.lane.b32.xlu0 %v526, 16
    %v553 = vpop.permute.xlu0 %552
    %554 = vrot.lane.b32.xlu0 %v530, 16
    %v555 = vpop.permute.xlu0 %554
    %556 = vrot.lane.b32.xlu0 %v519, 16
    %v557 = vpop.permute.xlu0 %556
    %558 = vrot.lane.b32.xlu0 %v523, 16
    %v559 = vpop.permute.xlu0 %558
    %560 = vrot.lane.b32.xlu0 %v527, 16
    %v561 = vpop.permute.xlu0 %560
    %562 = vrot.lane.b32.xlu0 %v531, 16
    %v563 = vpop.permute.xlu0 %562
    %v564 = vsel %vm91, %v549, %v557
    %v565 = vsel %vm91, %v551, %v559
    %v566 = vsel %vm91, %v553, %v561
    %v567 = vsel %vm91, %v555, %v563
    %v568 = vsel %vm91, %v541, %v549
    %v569 = vsel %vm91, %v543, %v551
    %v570 = vsel %vm91, %v545, %v553
    %v571 = vsel %vm91, %v547, %v555
    %v572 = vsel %vm91, %v533, %v541
    %v573 = vsel %vm91, %v535, %v543
    %v574 = vsel %vm91, %v537, %v545
    %v575 = vsel %vm91, %v539, %v547
    %v576 = vsel %vm91, %v557, %v533
    %v577 = vsel %vm91, %v559, %v535
    %v578 = vsel %vm91, %v561, %v537
    %v579 = vsel %vm91, %v563, %v539
    %v580 = vmul.f32 %v576, %v121
    %v581 = vmul.f32 %v572, %v125
    %v582 = vmul.f32 %v568, %v129
    %v583 = vmul.f32 %v564, %v133
    %v584 = vmul.f32 %v577, %v121
    %v585 = vmul.f32 %v573, %v125
    %v586 = vmul.f32 %v569, %v129
    %v587 = vmul.f32 %v565, %v133
    %v588 = vmul.f32 %v578, %v121
    %v589 = vmul.f32 %v574, %v125
    %v590 = vmul.f32 %v570, %v129
    %v591 = vmul.f32 %v566, %v133
    %v592 = vmul.f32 %v579, %v121
    %v593 = vmul.f32 %v575, %v125
    %v594 = vmul.f32 %v571, %v129
    %v595 = vmul.f32 %v567, %v133
    %596 = vrot.lane.b32.xlu0 %v516, 112
    %v597 = vpop.permute.xlu0 %596
    %598 = vrot.lane.b32.xlu0 %v520, 112
    %v599 = vpop.permute.xlu0 %598
    %600 = vrot.lane.b32.xlu0 %v524, 112
    %v601 = vpop.permute.xlu0 %600
    %602 = vrot.lane.b32.xlu0 %v528, 112
    %v603 = vpop.permute.xlu0 %602
    %604 = vrot.lane.b32.xlu0 %v517, 112
    %v605 = vpop.permute.xlu0 %604
    %606 = vrot.lane.b32.xlu0 %v521, 112
    %v607 = vpop.permute.xlu0 %606
    %608 = vrot.lane.b32.xlu0 %v525, 112
    %v609 = vpop.permute.xlu0 %608
    %610 = vrot.lane.b32.xlu0 %v529, 112
    %v611 = vpop.permute.xlu0 %610
    %612 = vrot.lane.b32.xlu0 %v518, 112
    %v613 = vpop.permute.xlu0 %612
    %614 = vrot.lane.b32.xlu0 %v522, 112
    %v615 = vpop.permute.xlu0 %614
    %616 = vrot.lane.b32.xlu0 %v526, 112
    %v617 = vpop.permute.xlu0 %616
    %618 = vrot.lane.b32.xlu0 %v530, 112
    %v619 = vpop.permute.xlu0 %618
    %620 = vrot.lane.b32.xlu0 %v519, 112
    %v621 = vpop.permute.xlu0 %620
    %622 = vrot.lane.b32.xlu0 %v523, 112
    %v623 = vpop.permute.xlu0 %622
    %624 = vrot.lane.b32.xlu0 %v527, 112
    %v625 = vpop.permute.xlu0 %624
    %626 = vrot.lane.b32.xlu0 %v531, 112
    %v627 = vpop.permute.xlu0 %626
    %v628 = vsel %vm146, %v613, %v621
    %v629 = vsel %vm146, %v615, %v623
    %v630 = vsel %vm146, %v617, %v625
    %v631 = vsel %vm146, %v619, %v627
    %v632 = vsel %vm146, %v605, %v613
    %v633 = vsel %vm146, %v607, %v615
    %v634 = vsel %vm146, %v609, %v617
    %v635 = vsel %vm146, %v611, %v619
    %v636 = vsel %vm146, %v597, %v605
    %v637 = vsel %vm146, %v599, %v607
    %v638 = vsel %vm146, %v601, %v609
    %v639 = vsel %vm146, %v603, %v611
    %v640 = vsel %vm146, %v621, %v597
    %v641 = vsel %vm146, %v623, %v599
    %v642 = vsel %vm146, %v625, %v601
    %v643 = vsel %vm146, %v627, %v603
    %v644 = vmul.f32 %v636, %v174
    %v645 = vmul.f32 %v632, %v178
    %v646 = vmul.f32 %v628, %v182
    %v647 = vmul.f32 %v640, %v186
    %v648 = vmul.f32 %v637, %v174
    %v649 = vmul.f32 %v633, %v178
    %v650 = vmul.f32 %v629, %v182
    %v651 = vmul.f32 %v641, %v186
    %v652 = vmul.f32 %v638, %v174
    %v653 = vmul.f32 %v634, %v178
    %v654 = vmul.f32 %v630, %v182
    %v655 = vmul.f32 %v642, %v186
    %v656 = vmul.f32 %v639, %v174
    %v657 = vmul.f32 %v635, %v178
    %v658 = vmul.f32 %v631, %v182
    %v659 = vmul.f32 %v643, %v186
    %660 = vrot.lane.b32.xlu0 %v516, 1
    %v661 = vpop.permute.xlu0 %660
    %662 = vrot.lane.b32.xlu0 %v520, 1
    %v663 = vpop.permute.xlu0 %662
    %664 = vrot.lane.b32.xlu0 %v524, 1
    %v665 = vpop.permute.xlu0 %664
    %666 = vrot.lane.b32.xlu0 %v528, 1
    %v667 = vpop.permute.xlu0 %666
    %668 = vrot.lane.b32.xlu0 %v517, 1
    %v669 = vpop.permute.xlu0 %668
    %670 = vrot.lane.b32.xlu0 %v521, 1
    %v671 = vpop.permute.xlu0 %670
    %672 = vrot.lane.b32.xlu0 %v525, 1
    %v673 = vpop.permute.xlu0 %672
    %674 = vrot.lane.b32.xlu0 %v529, 1
    %v675 = vpop.permute.xlu0 %674
    %676 = vrot.lane.b32.xlu0 %v518, 1
    %v677 = vpop.permute.xlu0 %676
    %678 = vrot.lane.b32.xlu0 %v522, 1
    %v679 = vpop.permute.xlu0 %678
    %680 = vrot.lane.b32.xlu0 %v526, 1
    %v681 = vpop.permute.xlu0 %680
    %682 = vrot.lane.b32.xlu0 %v530, 1
    %v683 = vpop.permute.xlu0 %682
    %684 = vrot.lane.b32.xlu0 %v519, 1
    %v685 = vpop.permute.xlu0 %684
    %686 = vrot.lane.b32.xlu0 %v523, 1
    %v687 = vpop.permute.xlu0 %686
    %688 = vrot.lane.b32.xlu0 %v527, 1
    %v689 = vpop.permute.xlu0 %688
    %690 = vrot.lane.b32.xlu0 %v531, 1
    %v691 = vpop.permute.xlu0 %690
    %v692 = vsel %vm199, %v677, %v685
    %v693 = vsel %vm199, %v679, %v687
    %v694 = vsel %vm199, %v681, %v689
    %v695 = vsel %vm199, %v683, %v691
    %v696 = vsel %vm199, %v669, %v677
    %v697 = vsel %vm199, %v671, %v679
    %v698 = vsel %vm199, %v673, %v681
    %v699 = vsel %vm199, %v675, %v683
    %v700 = vsel %vm199, %v661, %v669
    %v701 = vsel %vm199, %v663, %v671
    %v702 = vsel %vm199, %v665, %v673
    %v703 = vsel %vm199, %v667, %v675
    %v704 = vsel %vm199, %v685, %v661
    %v705 = vsel %vm199, %v687, %v663
    %v706 = vsel %vm199, %v689, %v665
    %v707 = vsel %vm199, %v691, %v667
    %v708 = vmul.f32 %v704, %v227
    %v709 = vmul.f32 %v700, %v231
    %v710 = vmul.f32 %v696, %v235
    %v711 = vmul.f32 %v692, %v239
    %v712 = vmul.f32 %v705, %v227
    %v713 = vmul.f32 %v701, %v231
    %v714 = vmul.f32 %v697, %v235
    %v715 = vmul.f32 %v693, %v239
    %v716 = vmul.f32 %v706, %v227
    %v717 = vmul.f32 %v702, %v231
    %v718 = vmul.f32 %v698, %v235
    %v719 = vmul.f32 %v694, %v239
    %v720 = vmul.f32 %v707, %v227
    %v721 = vmul.f32 %v703, %v231
    %v722 = vmul.f32 %v699, %v235
    %v723 = vmul.f32 %v695, %v239
    %724 = vrot.lane.b32.xlu0 %v516, 127
    %v725 = vpop.permute.xlu0 %724
    %726 = vrot.lane.b32.xlu0 %v520, 127
    %v727 = vpop.permute.xlu0 %726
    %728 = vrot.lane.b32.xlu0 %v524, 127
    %v729 = vpop.permute.xlu0 %728
    %730 = vrot.lane.b32.xlu0 %v528, 127
    %v731 = vpop.permute.xlu0 %730
    %732 = vrot.lane.b32.xlu0 %v517, 127
    %v733 = vpop.permute.xlu0 %732
    %734 = vrot.lane.b32.xlu0 %v521, 127
    %v735 = vpop.permute.xlu0 %734
    %736 = vrot.lane.b32.xlu0 %v525, 127
    %v737 = vpop.permute.xlu0 %736
    %738 = vrot.lane.b32.xlu0 %v529, 127
    %v739 = vpop.permute.xlu0 %738
    %740 = vrot.lane.b32.xlu0 %v518, 127
    %v741 = vpop.permute.xlu0 %740
    %742 = vrot.lane.b32.xlu0 %v522, 127
    %v743 = vpop.permute.xlu0 %742
    %744 = vrot.lane.b32.xlu0 %v526, 127
    %v745 = vpop.permute.xlu0 %744
    %746 = vrot.lane.b32.xlu0 %v530, 127
    %v747 = vpop.permute.xlu0 %746
    %748 = vrot.lane.b32.xlu0 %v519, 127
    %v749 = vpop.permute.xlu0 %748
    %750 = vrot.lane.b32.xlu0 %v523, 127
    %v751 = vpop.permute.xlu0 %750
    %752 = vrot.lane.b32.xlu0 %v527, 127
    %v753 = vpop.permute.xlu0 %752
    %754 = vrot.lane.b32.xlu0 %v531, 127
    %v755 = vpop.permute.xlu0 %754
    %v756 = vsel %vm252, %v741, %v749
    %v757 = vsel %vm252, %v743, %v751
    %v758 = vsel %vm252, %v745, %v753
    %v759 = vsel %vm252, %v747, %v755
    %v760 = vsel %vm252, %v733, %v741
    %v761 = vsel %vm252, %v735, %v743
    %v762 = vsel %vm252, %v737, %v745
    %v763 = vsel %vm252, %v739, %v747
    %v764 = vsel %vm252, %v725, %v733
    %v765 = vsel %vm252, %v727, %v735
    %v766 = vsel %vm252, %v729, %v737
    %v767 = vsel %vm252, %v731, %v739
    %v768 = vsel %vm252, %v749, %v725
    %v769 = vsel %vm252, %v751, %v727
    %v770 = vsel %vm252, %v753, %v729
    %v771 = vsel %vm252, %v755, %v731
    %v772 = vmul.f32 %v764, %v280
    %v773 = vmul.f32 %v760, %v284
    %v774 = vmul.f32 %v756, %v288
    %v775 = vmul.f32 %v768, %v292
    %v776 = vmul.f32 %v765, %v280
    %v777 = vmul.f32 %v761, %v284
    %v778 = vmul.f32 %v757, %v288
    %v779 = vmul.f32 %v769, %v292
    %v780 = vmul.f32 %v766, %v280
    %v781 = vmul.f32 %v762, %v284
    %v782 = vmul.f32 %v758, %v288
    %v783 = vmul.f32 %v770, %v292
    %v784 = vmul.f32 %v767, %v280
    %v785 = vmul.f32 %v763, %v284
    %v786 = vmul.f32 %v759, %v288
    %v787 = vmul.f32 %v771, %v292
    %v788 = vld [vmem:[%s4] sm:$0xff]
    %v789 = vld [vmem:[%s4 + $0x8] sm:$0xff]
    %v790 = vld [vmem:[%s4 + $0x10] sm:$0xff]
    %v791 = vld [vmem:[%s4 + $0x18] sm:$0xff]
    %v792 = vld [vmem:[%s4 + $0x20] sm:$0xff]
    %v793 = vld [vmem:[%s4 + $0x28] sm:$0xff]
    %v794 = vld [vmem:[%s4 + $0x30] sm:$0xff]
    %v795 = vld [vmem:[%s4 + $0x38] sm:$0xff]
    %v796 = vld [vmem:[%s5] sm:$0xff]
    %v797 = vld [vmem:[%s5 + $0x8] sm:$0xff]
    %v798 = vld [vmem:[%s5 + $0x10] sm:$0xff]
    %v799 = vld [vmem:[%s5 + $0x18] sm:$0xff]
    %801 = vset.pattern.permute.xlu0 0
    %802 = vperm.xlu0 %801, %v796
    %v803 = vpop.permute.xlu0 %802
    %806 = vset.pattern.permute.xlu0 0
    %807 = vperm.xlu0 %806, %v797
    %v808 = vpop.permute.xlu0 %807
    %811 = vset.pattern.permute.xlu0 0
    %812 = vperm.xlu0 %811, %v798
    %v813 = vpop.permute.xlu0 %812
    %816 = vset.pattern.permute.xlu0 0
    %817 = vperm.xlu0 %816, %v799
    %v818 = vpop.permute.xlu0 %817
    %vm820 = vcmask 261120
    %v822 = vsel %vm820, %v789, 0
    %v825 = vsel %vm820, %v791, 0
    %v828 = vsel %vm820, %v793, 0
    %v831 = vsel %vm820, %v795, 0
    %833 = vmatprep.subr.mxu0 %v721
    %834 = vmatpush1.msra.mxu0 %v720
    %835 = vmatprep.subr.mxu0 %v717
    %836 = vmatpush1.msra.mxu0 %v716
    %837 = vmatprep.subr.mxu0 %v713
    %838 = vmatpush1.msra.mxu0 %v712
    %839 = vmatprep.subr.mxu0 %v709
    %840 = vmatpush1.msra.mxu0 %v708
    %841 = vmatprep.subr.mxu0 %v657
    %842 = vmatpush1.msra.mxu0 %v656
    %843 = vmatprep.subr.mxu0 %v653
    %844 = vmatpush1.msra.mxu0 %v652
    %845 = vmatprep.subr.mxu0 %v649
    %846 = vmatpush1.msra.mxu0 %v648
    %847 = vmatprep.subr.mxu0 %v645
    %848 = vmatpush1.msra.mxu0 %v644
    %849 = vmatprep.subr.mxu0 %v593
    %850 = vmatpush1.msra.mxu0 %v592
    %851 = vmatprep.subr.mxu0 %v589
    %852 = vmatpush1.msra.mxu0 %v588
    %853 = vmatprep.subr.mxu0 %v585
    %854 = vmatpush1.msra.mxu0 %v584
    %855 = vmatprep.subr.mxu0 %v581
    %856 = vmatpush1.msra.mxu0 %v580
    %857 = vmatprep.subr.mxu0 %v529
    %858 = vmatpush1.msra.mxu0 %v528
    %859 = vmatprep.subr.mxu0 %v525
    %860 = vmatpush1.msra.mxu0 %v524
    %861 = vmatprep.subr.mxu0 %v521
    %862 = vmatpush1.msra.mxu0 %v520
    %863 = vmatprep.subr.mxu0 %v517
    %864 = vmatpush1.msra.mxu0 %v516
    %865 = vmatprep.subr.mxu0 0.0
    %866 = vmatpush2.msra.mxu0 0.0
    %867 = vmatprep.subr.mxu0 0.0
    %868 = vmatpush2.msra.mxu0 0.0
    %869 = vmatprep.subr.mxu0 0.0
    %870 = vmatpush2.msra.mxu0 0.0
    %871 = vmatprep.subr.mxu0 0.0
    %872 = vmatpush2.msra.mxu0 0.0
    %873 = vmatprep.subr.mxu0 0.0
    %874 = vmatpush2.msra.mxu0 0.0
    %875 = vmatprep.subr.mxu0 0.0
    %876 = vmatpush2.msra.mxu0 0.0
    %877 = vmatprep.subr.mxu0 0.0
    %878 = vmatpush2.msra.mxu0 0.0
    %879 = vmatprep.subr.mxu0 0.0
    %880 = vmatpush2.msra.mxu0 0.0
    %881 = vmatprep.subr.mxu0 0.0
    %882 = vmatpush2.msra.mxu0 0.0
    %883 = vmatprep.subr.mxu0 0.0
    %884 = vmatpush2.msra.mxu0 0.0
    %885 = vmatprep.subr.mxu0 0.0
    %886 = vmatpush2.msra.mxu0 0.0
    %887 = vmatprep.subr.mxu0 0.0
    %888 = vmatpush2.msra.mxu0 0.0
    %889 = vmatprep.subr.mxu0 %v785
    %890 = vmatpush2.msra.mxu0 %v784
    %891 = vmatprep.subr.mxu0 %v781
    %892 = vmatpush2.msra.mxu0 %v780
    %893 = vmatprep.subr.mxu0 %v777
    %894 = vmatpush2.msra.mxu0 %v776
    %895 = vmatprep.subr.mxu0 %v773
    %896 = vmatpush2.msra.mxu0 %v772
    %897 = vmatprep.mubr.f32.mxu0 %v822
    %898 = vmatmul.mubr.f32.gmra.mxu0 %v788
    %v899 = vpop.f32.mrf.mxu0
    %v900 = vadd.f32 %v803, %v899
    %v901 = vpop.f32.mrf.mxu0
    %v902 = vadd.f32 %v803, %v901
    %903 = vmatprep.mubr.f32.mxu0 %v825
    %904 = vmatmul.mubr.f32.gmra.mxu0 %v790
    %v905 = vpop.f32.mrf.mxu0
    %v906 = vadd.f32 %v808, %v905
    %v907 = vpop.f32.mrf.mxu0
    %v908 = vadd.f32 %v808, %v907
    %909 = vmatprep.mubr.f32.mxu0 %v828
    %910 = vmatmul.mubr.f32.gmra.mxu0 %v792
    %v911 = vpop.f32.mrf.mxu0
    %v912 = vadd.f32 %v813, %v911
    %v913 = vpop.f32.mrf.mxu0
    %v914 = vadd.f32 %v813, %v913
    %915 = vmatprep.mubr.f32.mxu0 %v831
    %916 = vmatmul.mubr.f32.gmra.mxu0 %v794
    %v917 = vpop.f32.mrf.mxu0
    %v918 = vadd.f32 %v818, %v917
    %v919 = vpop.f32.mrf.mxu0
    %v920 = vadd.f32 %v818, %v919
    %921 = vdwg.mxu0
    %922 = vmatprep.subr.mxu0 %v723
    %923 = vmatpush1.msra.mxu0 %v722
    %924 = vmatprep.subr.mxu0 %v719
    %925 = vmatpush1.msra.mxu0 %v718
    %926 = vmatprep.subr.mxu0 %v715
    %927 = vmatpush1.msra.mxu0 %v714
    %928 = vmatprep.subr.mxu0 %v711
    %929 = vmatpush1.msra.mxu0 %v710
    %930 = vmatprep.subr.mxu0 %v659
    %931 = vmatpush1.msra.mxu0 %v658
    %932 = vmatprep.subr.mxu0 %v655
    %933 = vmatpush1.msra.mxu0 %v654
    %934 = vmatprep.subr.mxu0 %v651
    %935 = vmatpush1.msra.mxu0 %v650
    %936 = vmatprep.subr.mxu0 %v647
    %937 = vmatpush1.msra.mxu0 %v646
    %938 = vmatprep.subr.mxu0 %v595
    %939 = vmatpush1.msra.mxu0 %v594
    %940 = vmatprep.subr.mxu0 %v591
    %941 = vmatpush1.msra.mxu0 %v590
    %942 = vmatprep.subr.mxu0 %v587
    %943 = vmatpush1.msra.mxu0 %v586
    %944 = vmatprep.subr.mxu0 %v583
    %945 = vmatpush1.msra.mxu0 %v582
    %946 = vmatprep.subr.mxu0 %v531
    %947 = vmatpush1.msra.mxu0 %v530
    %948 = vmatprep.subr.mxu0 %v527
    %949 = vmatpush1.msra.mxu0 %v526
    %950 = vmatprep.subr.mxu0 %v523
    %951 = vmatpush1.msra.mxu0 %v522
    %952 = vmatprep.subr.mxu0 %v519
    %953 = vmatpush1.msra.mxu0 %v518
    %954 = vmatprep.subr.mxu0 0.0
    %955 = vmatpush2.msra.mxu0 0.0
    %956 = vmatprep.subr.mxu0 0.0
    %957 = vmatpush2.msra.mxu0 0.0
    %958 = vmatprep.subr.mxu0 0.0
    %959 = vmatpush2.msra.mxu0 0.0
    %960 = vmatprep.subr.mxu0 0.0
    %961 = vmatpush2.msra.mxu0 0.0
    %962 = vmatprep.subr.mxu0 0.0
    %963 = vmatpush2.msra.mxu0 0.0
    %964 = vmatprep.subr.mxu0 0.0
    %965 = vmatpush2.msra.mxu0 0.0
    %966 = vmatprep.subr.mxu0 0.0
    %967 = vmatpush2.msra.mxu0 0.0
    %968 = vmatprep.subr.mxu0 0.0
    %969 = vmatpush2.msra.mxu0 0.0
    %970 = vmatprep.subr.mxu0 0.0
    %971 = vmatpush2.msra.mxu0 0.0
    %972 = vmatprep.subr.mxu0 0.0
    %973 = vmatpush2.msra.mxu0 0.0
    %974 = vmatprep.subr.mxu0 0.0
    %975 = vmatpush2.msra.mxu0 0.0
    %976 = vmatprep.subr.mxu0 0.0
    %977 = vmatpush2.msra.mxu0 0.0
    %978 = vmatprep.subr.mxu0 %v787
    %979 = vmatpush2.msra.mxu0 %v786
    %980 = vmatprep.subr.mxu0 %v783
    %981 = vmatpush2.msra.mxu0 %v782
    %982 = vmatprep.subr.mxu0 %v779
    %983 = vmatpush2.msra.mxu0 %v778
    %984 = vmatprep.subr.mxu0 %v775
    %985 = vmatpush2.msra.mxu0 %v774
    %986 = vmatprep.mubr.f32.mxu0 %v822
    %987 = vmatmul.mubr.f32.gmra.mxu0 %v788
    %v988 = vpop.f32.mrf.mxu0
    %v989 = vadd.f32 %v803, %v988
    %v990 = vpop.f32.mrf.mxu0
    %v991 = vadd.f32 %v803, %v990
    %992 = vmatprep.mubr.f32.mxu0 %v825
    %993 = vmatmul.mubr.f32.gmra.mxu0 %v790
    %v994 = vpop.f32.mrf.mxu0
    %v995 = vadd.f32 %v808, %v994
    %v996 = vpop.f32.mrf.mxu0
    %v997 = vadd.f32 %v808, %v996
    %998 = vmatprep.mubr.f32.mxu0 %v828
    %999 = vmatmul.mubr.f32.gmra.mxu0 %v792
    %v1000 = vpop.f32.mrf.mxu0
    %v1001 = vadd.f32 %v813, %v1000
    %v1002 = vpop.f32.mrf.mxu0
    %v1003 = vadd.f32 %v813, %v1002
    %1004 = vmatprep.mubr.f32.mxu0 %v831
    %1005 = vmatmul.mubr.f32.gmra.mxu0 %v794
    %v1006 = vpop.f32.mrf.mxu0
    %v1007 = vadd.f32 %v818, %v1006
    %v1008 = vpop.f32.mrf.mxu0
    %v1009 = vadd.f32 %v818, %v1008
    %1010 = vdwg.mxu0
    %v1011 = vmax.f32 %v900, 0.0
    %v1012 = vmax.f32 %v902, 0.0
    %v1013 = vmax.f32 %v989, 0.0
    %v1014 = vmax.f32 %v991, 0.0
    %v1015 = vmax.f32 %v906, 0.0
    %v1016 = vmax.f32 %v908, 0.0
    %v1017 = vmax.f32 %v995, 0.0
    %v1018 = vmax.f32 %v997, 0.0
    %v1019 = vmax.f32 %v912, 0.0
    %v1020 = vmax.f32 %v914, 0.0
    %v1021 = vmax.f32 %v1001, 0.0
    %v1022 = vmax.f32 %v1003, 0.0
    %v1023 = vmax.f32 %v918, 0.0
    %v1024 = vmax.f32 %v920, 0.0
    %v1025 = vmax.f32 %v1007, 0.0
    %v1026 = vmax.f32 %v1009, 0.0
    %1027 = vrot.lane.b32.xlu0 %v1011, 16
    %v1028 = vpop.permute.xlu0 %1027
    %1029 = vrot.lane.b32.xlu0 %v1015, 16
    %v1030 = vpop.permute.xlu0 %1029
    %1031 = vrot.lane.b32.xlu0 %v1019, 16
    %v1032 = vpop.permute.xlu0 %1031
    %1033 = vrot.lane.b32.xlu0 %v1023, 16
    %v1034 = vpop.permute.xlu0 %1033
    %1035 = vrot.lane.b32.xlu0 %v1012, 16
    %v1036 = vpop.permute.xlu0 %1035
    %1037 = vrot.lane.b32.xlu0 %v1016, 16
    %v1038 = vpop.permute.xlu0 %1037
    %1039 = vrot.lane.b32.xlu0 %v1020, 16
    %v1040 = vpop.permute.xlu0 %1039
    %1041 = vrot.lane.b32.xlu0 %v1024, 16
    %v1042 = vpop.permute.xlu0 %1041
    %1043 = vrot.lane.b32.xlu0 %v1013, 16
    %v1044 = vpop.permute.xlu0 %1043
    %1045 = vrot.lane.b32.xlu0 %v1017, 16
    %v1046 = vpop.permute.xlu0 %1045
    %1047 = vrot.lane.b32.xlu0 %v1021, 16
    %v1048 = vpop.permute.xlu0 %1047
    %1049 = vrot.lane.b32.xlu0 %v1025, 16
    %v1050 = vpop.permute.xlu0 %1049
    %1051 = vrot.lane.b32.xlu0 %v1014, 16
    %v1052 = vpop.permute.xlu0 %1051
    %1053 = vrot.lane.b32.xlu0 %v1018, 16
    %v1054 = vpop.permute.xlu0 %1053
    %1055 = vrot.lane.b32.xlu0 %v1022, 16
    %v1056 = vpop.permute.xlu0 %1055
    %1057 = vrot.lane.b32.xlu0 %v1026, 16
    %v1058 = vpop.permute.xlu0 %1057
    %v1059 = vsel %vm91, %v1044, %v1052
    %v1060 = vsel %vm91, %v1046, %v1054
    %v1061 = vsel %vm91, %v1048, %v1056
    %v1062 = vsel %vm91, %v1050, %v1058
    %v1063 = vsel %vm91, %v1036, %v1044
    %v1064 = vsel %vm91, %v1038, %v1046
    %v1065 = vsel %vm91, %v1040, %v1048
    %v1066 = vsel %vm91, %v1042, %v1050
    %v1067 = vsel %vm91, %v1028, %v1036
    %v1068 = vsel %vm91, %v1030, %v1038
    %v1069 = vsel %vm91, %v1032, %v1040
    %v1070 = vsel %vm91, %v1034, %v1042
    %v1071 = vsel %vm91, %v1052, %v1028
    %v1072 = vsel %vm91, %v1054, %v1030
    %v1073 = vsel %vm91, %v1056, %v1032
    %v1074 = vsel %vm91, %v1058, %v1034
    %v1075 = vmul.f32 %v1071, %v121
    %v1076 = vmul.f32 %v1067, %v125
    %v1077 = vmul.f32 %v1063, %v129
    %v1078 = vmul.f32 %v1059, %v133
    %v1079 = vmul.f32 %v1072, %v121
    %v1080 = vmul.f32 %v1068, %v125
    %v1081 = vmul.f32 %v1064, %v129
    %v1082 = vmul.f32 %v1060, %v133
    %v1083 = vmul.f32 %v1073, %v121
    %v1084 = vmul.f32 %v1069, %v125
    %v1085 = vmul.f32 %v1065, %v129
    %v1086 = vmul.f32 %v1061, %v133
    %v1087 = vmul.f32 %v1074, %v121
    %v1088 = vmul.f32 %v1070, %v125
    %v1089 = vmul.f32 %v1066, %v129
    %v1090 = vmul.f32 %v1062, %v133
    %1091 = vrot.lane.b32.xlu0 %v1011, 112
    %v1092 = vpop.permute.xlu0 %1091
    %1093 = vrot.lane.b32.xlu0 %v1015, 112
    %v1094 = vpop.permute.xlu0 %1093
    %1095 = vrot.lane.b32.xlu0 %v1019, 112
    %v1096 = vpop.permute.xlu0 %1095
    %1097 = vrot.lane.b32.xlu0 %v1023, 112
    %v1098 = vpop.permute.xlu0 %1097
    %1099 = vrot.lane.b32.xlu0 %v1012, 112
    %v1100 = vpop.permute.xlu0 %1099
    %1101 = vrot.lane.b32.xlu0 %v1016, 112
    %v1102 = vpop.permute.xlu0 %1101
    %1103 = vrot.lane.b32.xlu0 %v1020, 112
    %v1104 = vpop.permute.xlu0 %1103
    %1105 = vrot.lane.b32.xlu0 %v1024, 112
    %v1106 = vpop.permute.xlu0 %1105
    %1107 = vrot.lane.b32.xlu0 %v1013, 112
    %v1108 = vpop.permute.xlu0 %1107
    %1109 = vrot.lane.b32.xlu0 %v1017, 112
    %v1110 = vpop.permute.xlu0 %1109
    %1111 = vrot.lane.b32.xlu0 %v1021, 112
    %v1112 = vpop.permute.xlu0 %1111
    %1113 = vrot.lane.b32.xlu0 %v1025, 112
    %v1114 = vpop.permute.xlu0 %1113
    %1115 = vrot.lane.b32.xlu0 %v1014, 112
    %v1116 = vpop.permute.xlu0 %1115
    %1117 = vrot.lane.b32.xlu0 %v1018, 112
    %v1118 = vpop.permute.xlu0 %1117
    %1119 = vrot.lane.b32.xlu0 %v1022, 112
    %v1120 = vpop.permute.xlu0 %1119
    %1121 = vrot.lane.b32.xlu0 %v1026, 112
    %v1122 = vpop.permute.xlu0 %1121
    %v1123 = vsel %vm146, %v1108, %v1116
    %v1124 = vsel %vm146, %v1110, %v1118
    %v1125 = vsel %vm146, %v1112, %v1120
    %v1126 = vsel %vm146, %v1114, %v1122
    %v1127 = vsel %vm146, %v1100, %v1108
    %v1128 = vsel %vm146, %v1102, %v1110
    %v1129 = vsel %vm146, %v1104, %v1112
    %v1130 = vsel %vm146, %v1106, %v1114
    %v1131 = vsel %vm146, %v1092, %v1100
    %v1132 = vsel %vm146, %v1094, %v1102
    %v1133 = vsel %vm146, %v1096, %v1104
    %v1134 = vsel %vm146, %v1098, %v1106
    %v1135 = vsel %vm146, %v1116, %v1092
    %v1136 = vsel %vm146, %v1118, %v1094
    %v1137 = vsel %vm146, %v1120, %v1096
    %v1138 = vsel %vm146, %v1122, %v1098
    %v1139 = vmul.f32 %v1131, %v174
    %v1140 = vmul.f32 %v1127, %v178
    %v1141 = vmul.f32 %v1123, %v182
    %v1142 = vmul.f32 %v1135, %v186
    %v1143 = vmul.f32 %v1132, %v174
    %v1144 = vmul.f32 %v1128, %v178
    %v1145 = vmul.f32 %v1124, %v182
    %v1146 = vmul.f32 %v1136, %v186
    %v1147 = vmul.f32 %v1133, %v174
    %v1148 = vmul.f32 %v1129, %v178
    %v1149 = vmul.f32 %v1125, %v182
    %v1150 = vmul.f32 %v1137, %v186
    %v1151 = vmul.f32 %v1134, %v174
    %v1152 = vmul.f32 %v1130, %v178
    %v1153 = vmul.f32 %v1126, %v182
    %v1154 = vmul.f32 %v1138, %v186
    %1155 = vrot.lane.b32.xlu0 %v1011, 1
    %v1156 = vpop.permute.xlu0 %1155
    %1157 = vrot.lane.b32.xlu0 %v1015, 1
    %v1158 = vpop.permute.xlu0 %1157
    %1159 = vrot.lane.b32.xlu0 %v1019, 1
    %v1160 = vpop.permute.xlu0 %1159
    %1161 = vrot.lane.b32.xlu0 %v1023, 1
    %v1162 = vpop.permute.xlu0 %1161
    %1163 = vrot.lane.b32.xlu0 %v1012, 1
    %v1164 = vpop.permute.xlu0 %1163
    %1165 = vrot.lane.b32.xlu0 %v1016, 1
    %v1166 = vpop.permute.xlu0 %1165
    %1167 = vrot.lane.b32.xlu0 %v1020, 1
    %v1168 = vpop.permute.xlu0 %1167
    %1169 = vrot.lane.b32.xlu0 %v1024, 1
    %v1170 = vpop.permute.xlu0 %1169
    %1171 = vrot.lane.b32.xlu0 %v1013, 1
    %v1172 = vpop.permute.xlu0 %1171
    %1173 = vrot.lane.b32.xlu0 %v1017, 1
    %v1174 = vpop.permute.xlu0 %1173
    %1175 = vrot.lane.b32.xlu0 %v1021, 1
    %v1176 = vpop.permute.xlu0 %1175
    %1177 = vrot.lane.b32.xlu0 %v1025, 1
    %v1178 = vpop.permute.xlu0 %1177
    %1179 = vrot.lane.b32.xlu0 %v1014, 1
    %v1180 = vpop.permute.xlu0 %1179
    %1181 = vrot.lane.b32.xlu0 %v1018, 1
    %v1182 = vpop.permute.xlu0 %1181
    %1183 = vrot.lane.b32.xlu0 %v1022, 1
    %v1184 = vpop.permute.xlu0 %1183
    %1185 = vrot.lane.b32.xlu0 %v1026, 1
    %v1186 = vpop.permute.xlu0 %1185
    %v1187 = vsel %vm199, %v1172, %v1180
    %v1188 = vsel %vm199, %v1174, %v1182
    %v1189 = vsel %vm199, %v1176, %v1184
    %v1190 = vsel %vm199, %v1178, %v1186
    %v1191 = vsel %vm199, %v1164, %v1172
    %v1192 = vsel %vm199, %v1166, %v1174
    %v1193 = vsel %vm199, %v1168, %v1176
    %v1194 = vsel %vm199, %v1170, %v1178
    %v1195 = vsel %vm199, %v1156, %v1164
    %v1196 = vsel %vm199, %v1158, %v1166
    %v1197 = vsel %vm199, %v1160, %v1168
    %v1198 = vsel %vm199, %v1162, %v1170
    %v1199 = vsel %vm199, %v1180, %v1156
    %v1200 = vsel %vm199, %v1182, %v1158
    %v1201 = vsel %vm199, %v1184, %v1160
    %v1202 = vsel %vm199, %v1186, %v1162
    %v1203 = vmul.f32 %v1199, %v227
    %v1204 = vmul.f32 %v1195, %v231
    %v1205 = vmul.f32 %v1191, %v235
    %v1206 = vmul.f32 %v1187, %v239
    %v1207 = vmul.f32 %v1200, %v227
    %v1208 = vmul.f32 %v1196, %v231
    %v1209 = vmul.f32 %v1192, %v235
    %v1210 = vmul.f32 %v1188, %v239
    %v1211 = vmul.f32 %v1201, %v227
    %v1212 = vmul.f32 %v1197, %v231
    %v1213 = vmul.f32 %v1193, %v235
    %v1214 = vmul.f32 %v1189, %v239
    %v1215 = vmul.f32 %v1202, %v227
    %v1216 = vmul.f32 %v1198, %v231
    %v1217 = vmul.f32 %v1194, %v235
    %v1218 = vmul.f32 %v1190, %v239
    %1219 = vrot.lane.b32.xlu0 %v1011, 127
    %v1220 = vpop.permute.xlu0 %1219
    %1221 = vrot.lane.b32.xlu0 %v1015, 127
    %v1222 = vpop.permute.xlu0 %1221
    %1223 = vrot.lane.b32.xlu0 %v1019, 127
    %v1224 = vpop.permute.xlu0 %1223
    %1225 = vrot.lane.b32.xlu0 %v1023, 127
    %v1226 = vpop.permute.xlu0 %1225
    %1227 = vrot.lane.b32.xlu0 %v1012, 127
    %v1228 = vpop.permute.xlu0 %1227
    %1229 = vrot.lane.b32.xlu0 %v1016, 127
    %v1230 = vpop.permute.xlu0 %1229
    %1231 = vrot.lane.b32.xlu0 %v1020, 127
    %v1232 = vpop.permute.xlu0 %1231
    %1233 = vrot.lane.b32.xlu0 %v1024, 127
    %v1234 = vpop.permute.xlu0 %1233
    %1235 = vrot.lane.b32.xlu0 %v1013, 127
    %v1236 = vpop.permute.xlu0 %1235
    %1237 = vrot.lane.b32.xlu0 %v1017, 127
    %v1238 = vpop.permute.xlu0 %1237
    %1239 = vrot.lane.b32.xlu0 %v1021, 127
    %v1240 = vpop.permute.xlu0 %1239
    %1241 = vrot.lane.b32.xlu0 %v1025, 127
    %v1242 = vpop.permute.xlu0 %1241
    %1243 = vrot.lane.b32.xlu0 %v1014, 127
    %v1244 = vpop.permute.xlu0 %1243
    %1245 = vrot.lane.b32.xlu0 %v1018, 127
    %v1246 = vpop.permute.xlu0 %1245
    %1247 = vrot.lane.b32.xlu0 %v1022, 127
    %v1248 = vpop.permute.xlu0 %1247
    %1249 = vrot.lane.b32.xlu0 %v1026, 127
    %v1250 = vpop.permute.xlu0 %1249
    %v1251 = vsel %vm252, %v1236, %v1244
    %v1252 = vsel %vm252, %v1238, %v1246
    %v1253 = vsel %vm252, %v1240, %v1248
    %v1254 = vsel %vm252, %v1242, %v1250
    %v1255 = vsel %vm252, %v1228, %v1236
    %v1256 = vsel %vm252, %v1230, %v1238
    %v1257 = vsel %vm252, %v1232, %v1240
    %v1258 = vsel %vm252, %v1234, %v1242
    %v1259 = vsel %vm252, %v1220, %v1228
    %v1260 = vsel %vm252, %v1222, %v1230
    %v1261 = vsel %vm252, %v1224, %v1232
    %v1262 = vsel %vm252, %v1226, %v1234
    %v1263 = vsel %vm252, %v1244, %v1220
    %v1264 = vsel %vm252, %v1246, %v1222
    %v1265 = vsel %vm252, %v1248, %v1224
    %v1266 = vsel %vm252, %v1250, %v1226
    %v1267 = vmul.f32 %v1259, %v280
    %v1268 = vmul.f32 %v1255, %v284
    %v1269 = vmul.f32 %v1251, %v288
    %v1270 = vmul.f32 %v1263, %v292
    %v1271 = vmul.f32 %v1260, %v280
    %v1272 = vmul.f32 %v1256, %v284
    %v1273 = vmul.f32 %v1252, %v288
    %v1274 = vmul.f32 %v1264, %v292
    %v1275 = vmul.f32 %v1261, %v280
    %v1276 = vmul.f32 %v1257, %v284
    %v1277 = vmul.f32 %v1253, %v288
    %v1278 = vmul.f32 %v1265, %v292
    %v1279 = vmul.f32 %v1262, %v280
    %v1280 = vmul.f32 %v1258, %v284
    %v1281 = vmul.f32 %v1254, %v288
    %v1282 = vmul.f32 %v1266, %v292
    %v1283 = vld [vmem:[#allocation4] sm:$0xff]
    %v1284 = vld [vmem:[#allocation4 + $0x8] sm:$0xff]
    %v1285 = vld [vmem:[#allocation4 + $0x10] sm:$0xff]
    %v1286 = vld [vmem:[#allocation4 + $0x18] sm:$0xff]
    %v1287 = vld [vmem:[#allocation4 + $0x20] sm:$0xff]
    %v1288 = vld [vmem:[#allocation4 + $0x28] sm:$0xff]
    %v1289 = vld [vmem:[#allocation4 + $0x30] sm:$0xff]
    %v1290 = vld [vmem:[#allocation4 + $0x38] sm:$0xff]
    %v1291 = vld [vmem:[%s7] sm:$0xff]
    %v1292 = vld [vmem:[%s7 + $0x8] sm:$0xff]
    %v1293 = vld [vmem:[%s7 + $0x10] sm:$0xff]
    %v1294 = vld [vmem:[%s7 + $0x18] sm:$0xff]
    %1296 = vset.pattern.permute.xlu0 0
    %1297 = vperm.xlu0 %1296, %v1291
    %v1298 = vpop.permute.xlu0 %1297
    %1301 = vset.pattern.permute.xlu0 0
    %1302 = vperm.xlu0 %1301, %v1292
    %v1303 = vpop.permute.xlu0 %1302
    %1306 = vset.pattern.permute.xlu0 0
    %1307 = vperm.xlu0 %1306, %v1293
    %v1308 = vpop.permute.xlu0 %1307
    %1311 = vset.pattern.permute.xlu0 0
    %1312 = vperm.xlu0 %1311, %v1294
    %v1313 = vpop.permute.xlu0 %1312
    %v1316 = vsel %vm820, %v1284, 0
    %v1319 = vsel %vm820, %v1286, 0
    %v1322 = vsel %vm820, %v1288, 0
    %v1325 = vsel %vm820, %v1290, 0
    %1327 = vmatprep.subr.mxu0 %v1216
    %1328 = vmatpush1.msra.mxu0 %v1215
    %1329 = vmatprep.subr.mxu0 %v1212
    %1330 = vmatpush1.msra.mxu0 %v1211
    %1331 = vmatprep.subr.mxu0 %v1208
    %1332 = vmatpush1.msra.mxu0 %v1207
    %1333 = vmatprep.subr.mxu0 %v1204
    %1334 = vmatpush1.msra.mxu0 %v1203
    %1335 = vmatprep.subr.mxu0 %v1152
    %1336 = vmatpush1.msra.mxu0 %v1151
    %1337 = vmatprep.subr.mxu0 %v1148
    %1338 = vmatpush1.msra.mxu0 %v1147
    %1339 = vmatprep.subr.mxu0 %v1144
    %1340 = vmatpush1.msra.mxu0 %v1143
    %1341 = vmatprep.subr.mxu0 %v1140
    %1342 = vmatpush1.msra.mxu0 %v1139
    %1343 = vmatprep.subr.mxu0 %v1088
    %1344 = vmatpush1.msra.mxu0 %v1087
    %1345 = vmatprep.subr.mxu0 %v1084
    %1346 = vmatpush1.msra.mxu0 %v1083
    %1347 = vmatprep.subr.mxu0 %v1080
    %1348 = vmatpush1.msra.mxu0 %v1079
    %1349 = vmatprep.subr.mxu0 %v1076
    %1350 = vmatpush1.msra.mxu0 %v1075
    %1351 = vmatprep.subr.mxu0 %v1024
    %1352 = vmatpush1.msra.mxu0 %v1023
    %1353 = vmatprep.subr.mxu0 %v1020
    %1354 = vmatpush1.msra.mxu0 %v1019
    %1355 = vmatprep.subr.mxu0 %v1016
    %1356 = vmatpush1.msra.mxu0 %v1015
    %1357 = vmatprep.subr.mxu0 %v1012
    %1358 = vmatpush1.msra.mxu0 %v1011
    %1359 = vmatprep.subr.mxu0 0.0
    %1360 = vmatpush2.msra.mxu0 0.0
    %1361 = vmatprep.subr.mxu0 0.0
    %1362 = vmatpush2.msra.mxu0 0.0
    %1363 = vmatprep.subr.mxu0 0.0
    %1364 = vmatpush2.msra.mxu0 0.0
    %1365 = vmatprep.subr.mxu0 0.0
    %1366 = vmatpush2.msra.mxu0 0.0
    %1367 = vmatprep.subr.mxu0 0.0
    %1368 = vmatpush2.msra.mxu0 0.0
    %1369 = vmatprep.subr.mxu0 0.0
    %1370 = vmatpush2.msra.mxu0 0.0
    %1371 = vmatprep.subr.mxu0 0.0
    %1372 = vmatpush2.msra.mxu0 0.0
    %1373 = vmatprep.subr.mxu0 0.0
    %1374 = vmatpush2.msra.mxu0 0.0
    %1375 = vmatprep.subr.mxu0 0.0
    %1376 = vmatpush2.msra.mxu0 0.0
    %1377 = vmatprep.subr.mxu0 0.0
    %1378 = vmatpush2.msra.mxu0 0.0
    %1379 = vmatprep.subr.mxu0 0.0
    %1380 = vmatpush2.msra.mxu0 0.0
    %1381 = vmatprep.subr.mxu0 0.0
    %1382 = vmatpush2.msra.mxu0 0.0
    %1383 = vmatprep.subr.mxu0 %v1280
    %1384 = vmatpush2.msra.mxu0 %v1279
    %1385 = vmatprep.subr.mxu0 %v1276
    %1386 = vmatpush2.msra.mxu0 %v1275
    %1387 = vmatprep.subr.mxu0 %v1272
    %1388 = vmatpush2.msra.mxu0 %v1271
    %1389 = vmatprep.subr.mxu0 %v1268
    %1390 = vmatpush2.msra.mxu0 %v1267
    %1391 = vmatprep.mubr.f32.mxu0 %v1316
    %1392 = vmatmul.mubr.f32.gmra.mxu0 %v1283
    %v1393 = vpop.f32.mrf.mxu0
    %v1394 = vadd.f32 %v1298, %v1393
    %v1395 = vpop.f32.mrf.mxu0
    %v1396 = vadd.f32 %v1298, %v1395
    %1397 = vmatprep.mubr.f32.mxu0 %v1319
    %1398 = vmatmul.mubr.f32.gmra.mxu0 %v1285
    %v1399 = vpop.f32.mrf.mxu0
    %v1400 = vadd.f32 %v1303, %v1399
    %v1401 = vpop.f32.mrf.mxu0
    %v1402 = vadd.f32 %v1303, %v1401
    %1403 = vmatprep.mubr.f32.mxu0 %v1322
    %1404 = vmatmul.mubr.f32.gmra.mxu0 %v1287
    %v1405 = vpop.f32.mrf.mxu0
    %v1406 = vadd.f32 %v1308, %v1405
    %v1407 = vpop.f32.mrf.mxu0
    %v1408 = vadd.f32 %v1308, %v1407
    %1409 = vmatprep.mubr.f32.mxu0 %v1325
    %1410 = vmatmul.mubr.f32.gmra.mxu0 %v1289
    %v1411 = vpop.f32.mrf.mxu0
    %v1412 = vadd.f32 %v1313, %v1411
    %v1413 = vpop.f32.mrf.mxu0
    %v1414 = vadd.f32 %v1313, %v1413
    %1415 = vdwg.mxu0
    %1416 = vmatprep.subr.mxu0 %v1218
    %1417 = vmatpush1.msra.mxu0 %v1217
    %1418 = vmatprep.subr.mxu0 %v1214
    %1419 = vmatpush1.msra.mxu0 %v1213
    %1420 = vmatprep.subr.mxu0 %v1210
    %1421 = vmatpush1.msra.mxu0 %v1209
    %1422 = vmatprep.subr.mxu0 %v1206
    %1423 = vmatpush1.msra.mxu0 %v1205
    %1424 = vmatprep.subr.mxu0 %v1154
    %1425 = vmatpush1.msra.mxu0 %v1153
    %1426 = vmatprep.subr.mxu0 %v1150
    %1427 = vmatpush1.msra.mxu0 %v1149
    %1428 = vmatprep.subr.mxu0 %v1146
    %1429 = vmatpush1.msra.mxu0 %v1145
    %1430 = vmatprep.subr.mxu0 %v1142
    %1431 = vmatpush1.msra.mxu0 %v1141
    %1432 = vmatprep.subr.mxu0 %v1090
    %1433 = vmatpush1.msra.mxu0 %v1089
    %1434 = vmatprep.subr.mxu0 %v1086
    %1435 = vmatpush1.msra.mxu0 %v1085
    %1436 = vmatprep.subr.mxu0 %v1082
    %1437 = vmatpush1.msra.mxu0 %v1081
    %1438 = vmatprep.subr.mxu0 %v1078
    %1439 = vmatpush1.msra.mxu0 %v1077
    %1440 = vmatprep.subr.mxu0 %v1026
    %1441 = vmatpush1.msra.mxu0 %v1025
    %1442 = vmatprep.subr.mxu0 %v1022
    %1443 = vmatpush1.msra.mxu0 %v1021
    %1444 = vmatprep.subr.mxu0 %v1018
    %1445 = vmatpush1.msra.mxu0 %v1017
    %1446 = vmatprep.subr.mxu0 %v1014
    %1447 = vmatpush1.msra.mxu0 %v1013
    %1448 = vmatprep.subr.mxu0 0.0
    %1449 = vmatpush2.msra.mxu0 0.0
    %1450 = vmatprep.subr.mxu0 0.0
    %1451 = vmatpush2.msra.mxu0 0.0
    %1452 = vmatprep.subr.mxu0 0.0
    %1453 = vmatpush2.msra.mxu0 0.0
    %1454 = vmatprep.subr.mxu0 0.0
    %1455 = vmatpush2.msra.mxu0 0.0
    %1456 = vmatprep.subr.mxu0 0.0
    %1457 = vmatpush2.msra.mxu0 0.0
    %1458 = vmatprep.subr.mxu0 0.0
    %1459 = vmatpush2.msra.mxu0 0.0
    %1460 = vmatprep.subr.mxu0 0.0
    %1461 = vmatpush2.msra.mxu0 0.0
    %1462 = vmatprep.subr.mxu0 0.0
    %1463 = vmatpush2.msra.mxu0 0.0
    %1464 = vmatprep.subr.mxu0 0.0
    %1465 = vmatpush2.msra.mxu0 0.0
    %1466 = vmatprep.subr.mxu0 0.0
    %1467 = vmatpush2.msra.mxu0 0.0
    %1468 = vmatprep.subr.mxu0 0.0
    %1469 = vmatpush2.msra.mxu0 0.0
    %1470 = vmatprep.subr.mxu0 0.0
    %1471 = vmatpush2.msra.mxu0 0.0
    %1472 = vmatprep.subr.mxu0 %v1282
    %1473 = vmatpush2.msra.mxu0 %v1281
    %1474 = vmatprep.subr.mxu0 %v1278
    %1475 = vmatpush2.msra.mxu0 %v1277
    %1476 = vmatprep.subr.mxu0 %v1274
    %1477 = vmatpush2.msra.mxu0 %v1273
    %1478 = vmatprep.subr.mxu0 %v1270
    %1479 = vmatpush2.msra.mxu0 %v1269
    %1480 = vmatprep.mubr.f32.mxu0 %v1316
    %1481 = vmatmul.mubr.f32.gmra.mxu0 %v1283
    %v1482 = vpop.f32.mrf.mxu0
    %v1483 = vadd.f32 %v1298, %v1482
    %v1484 = vpop.f32.mrf.mxu0
    %v1485 = vadd.f32 %v1298, %v1484
    %1486 = vmatprep.mubr.f32.mxu0 %v1319
    %1487 = vmatmul.mubr.f32.gmra.mxu0 %v1285
    %v1488 = vpop.f32.mrf.mxu0
    %v1489 = vadd.f32 %v1303, %v1488
    %v1490 = vpop.f32.mrf.mxu0
    %v1491 = vadd.f32 %v1303, %v1490
    %1492 = vmatprep.mubr.f32.mxu0 %v1322
    %1493 = vmatmul.mubr.f32.gmra.mxu0 %v1287
    %v1494 = vpop.f32.mrf.mxu0
    %v1495 = vadd.f32 %v1308, %v1494
    %v1496 = vpop.f32.mrf.mxu0
    %v1497 = vadd.f32 %v1308, %v1496
    %1498 = vmatprep.mubr.f32.mxu0 %v1325
    %1499 = vmatmul.mubr.f32.gmra.mxu0 %v1289
    %v1500 = vpop.f32.mrf.mxu0
    %v1501 = vadd.f32 %v1313, %v1500
    %v1502 = vpop.f32.mrf.mxu0
    %v1503 = vadd.f32 %v1313, %v1502
    %1504 = vdwg.mxu0
    %v1505 = vmax.f32 %v1394, 0.0
    %v1506 = vmax.f32 %v1396, 0.0
    %v1507 = vmax.f32 %v1483, 0.0
    %v1508 = vmax.f32 %v1485, 0.0
    %v1509 = vmax.f32 %v1400, 0.0
    %v1510 = vmax.f32 %v1402, 0.0
    %v1511 = vmax.f32 %v1489, 0.0
    %v1512 = vmax.f32 %v1491, 0.0
    %v1513 = vmax.f32 %v1406, 0.0
    %v1514 = vmax.f32 %v1408, 0.0
    %v1515 = vmax.f32 %v1495, 0.0
    %v1516 = vmax.f32 %v1497, 0.0
    %v1517 = vmax.f32 %v1412, 0.0
    %v1518 = vmax.f32 %v1414, 0.0
    %v1519 = vmax.f32 %v1501, 0.0
    %v1520 = vmax.f32 %v1503, 0.0
    %1521 = vrot.lane.b32.xlu0 %v1505, 16
    %v1522 = vpop.permute.xlu0 %1521
    %1523 = vrot.lane.b32.xlu0 %v1509, 16
    %v1524 = vpop.permute.xlu0 %1523
    %1525 = vrot.lane.b32.xlu0 %v1513, 16
    %v1526 = vpop.permute.xlu0 %1525
    %1527 = vrot.lane.b32.xlu0 %v1517, 16
    %v1528 = vpop.permute.xlu0 %1527
    %1529 = vrot.lane.b32.xlu0 %v1506, 16
    %v1530 = vpop.permute.xlu0 %1529
    %1531 = vrot.lane.b32.xlu0 %v1510, 16
    %v1532 = vpop.permute.xlu0 %1531
    %1533 = vrot.lane.b32.xlu0 %v1514, 16
    %v1534 = vpop.permute.xlu0 %1533
    %1535 = vrot.lane.b32.xlu0 %v1518, 16
    %v1536 = vpop.permute.xlu0 %1535
    %1537 = vrot.lane.b32.xlu0 %v1507, 16
    %v1538 = vpop.permute.xlu0 %1537
    %1539 = vrot.lane.b32.xlu0 %v1511, 16
    %v1540 = vpop.permute.xlu0 %1539
    %1541 = vrot.lane.b32.xlu0 %v1515, 16
    %v1542 = vpop.permute.xlu0 %1541
    %1543 = vrot.lane.b32.xlu0 %v1519, 16
    %v1544 = vpop.permute.xlu0 %1543
    %1545 = vrot.lane.b32.xlu0 %v1508, 16
    %v1546 = vpop.permute.xlu0 %1545
    %1547 = vrot.lane.b32.xlu0 %v1512, 16
    %v1548 = vpop.permute.xlu0 %1547
    %1549 = vrot.lane.b32.xlu0 %v1516, 16
    %v1550 = vpop.permute.xlu0 %1549
    %1551 = vrot.lane.b32.xlu0 %v1520, 16
    %v1552 = vpop.permute.xlu0 %1551
    %v1553 = vsel %vm91, %v1538, %v1546
    %v1554 = vsel %vm91, %v1540, %v1548
    %v1555 = vsel %vm91, %v1542, %v1550
    %v1556 = vsel %vm91, %v1544, %v1552
    %v1557 = vsel %vm91, %v1530, %v1538
    %v1558 = vsel %vm91, %v1532, %v1540
    %v1559 = vsel %vm91, %v1534, %v1542
    %v1560 = vsel %vm91, %v1536, %v1544
    %v1561 = vsel %vm91, %v1522, %v1530
    %v1562 = vsel %vm91, %v1524, %v1532
    %v1563 = vsel %vm91, %v1526, %v1534
    %v1564 = vsel %vm91, %v1528, %v1536
    %v1565 = vsel %vm91, %v1546, %v1522
    %v1566 = vsel %vm91, %v1548, %v1524
    %v1567 = vsel %vm91, %v1550, %v1526
    %v1568 = vsel %vm91, %v1552, %v1528
    %v1569 = vmul.f32 %v1565, %v121
    %v1570 = vmul.f32 %v1561, %v125
    %v1571 = vmul.f32 %v1557, %v129
    %v1572 = vmul.f32 %v1553, %v133
    %v1573 = vmul.f32 %v1566, %v121
    %v1574 = vmul.f32 %v1562, %v125
    %v1575 = vmul.f32 %v1558, %v129
    %v1576 = vmul.f32 %v1554, %v133
    %v1577 = vmul.f32 %v1567, %v121
    %v1578 = vmul.f32 %v1563, %v125
    %v1579 = vmul.f32 %v1559, %v129
    %v1580 = vmul.f32 %v1555, %v133
    %v1581 = vmul.f32 %v1568, %v121
    %v1582 = vmul.f32 %v1564, %v125
    %v1583 = vmul.f32 %v1560, %v129
    %v1584 = vmul.f32 %v1556, %v133
    %1585 = vrot.lane.b32.xlu0 %v1505, 112
    %v1586 = vpop.permute.xlu0 %1585
    %1587 = vrot.lane.b32.xlu0 %v1509, 112
    %v1588 = vpop.permute.xlu0 %1587
    %1589 = vrot.lane.b32.xlu0 %v1513, 112
    %v1590 = vpop.permute.xlu0 %1589
    %1591 = vrot.lane.b32.xlu0 %v1517, 112
    %v1592 = vpop.permute.xlu0 %1591
    %1593 = vrot.lane.b32.xlu0 %v1506, 112
    %v1594 = vpop.permute.xlu0 %1593
    %1595 = vrot.lane.b32.xlu0 %v1510, 112
    %v1596 = vpop.permute.xlu0 %1595
    %1597 = vrot.lane.b32.xlu0 %v1514, 112
    %v1598 = vpop.permute.xlu0 %1597
    %1599 = vrot.lane.b32.xlu0 %v1518, 112
    %v1600 = vpop.permute.xlu0 %1599
    %1601 = vrot.lane.b32.xlu0 %v1507, 112
    %v1602 = vpop.permute.xlu0 %1601
    %1603 = vrot.lane.b32.xlu0 %v1511, 112
    %v1604 = vpop.permute.xlu0 %1603
    %1605 = vrot.lane.b32.xlu0 %v1515, 112
    %v1606 = vpop.permute.xlu0 %1605
    %1607 = vrot.lane.b32.xlu0 %v1519, 112
    %v1608 = vpop.permute.xlu0 %1607
    %1609 = vrot.lane.b32.xlu0 %v1508, 112
    %v1610 = vpop.permute.xlu0 %1609
    %1611 = vrot.lane.b32.xlu0 %v1512, 112
    %v1612 = vpop.permute.xlu0 %1611
    %1613 = vrot.lane.b32.xlu0 %v1516, 112
    %v1614 = vpop.permute.xlu0 %1613
    %1615 = vrot.lane.b32.xlu0 %v1520, 112
    %v1616 = vpop.permute.xlu0 %1615
    %v1617 = vsel %vm146, %v1602, %v1610
    %v1618 = vsel %vm146, %v1604, %v1612
    %v1619 = vsel %vm146, %v1606, %v1614
    %v1620 = vsel %vm146, %v1608, %v1616
    %v1621 = vsel %vm146, %v1594, %v1602
    %v1622 = vsel %vm146, %v1596, %v1604
    %v1623 = vsel %vm146, %v1598, %v1606
    %v1624 = vsel %vm146, %v1600, %v1608
    %v1625 = vsel %vm146, %v1586, %v1594
    %v1626 = vsel %vm146, %v1588, %v1596
    %v1627 = vsel %vm146, %v1590, %v1598
    %v1628 = vsel %vm146, %v1592, %v1600
    %v1629 = vsel %vm146, %v1610, %v1586
    %v1630 = vsel %vm146, %v1612, %v1588
    %v1631 = vsel %vm146, %v1614, %v1590
    %v1632 = vsel %vm146, %v1616, %v1592
    %v1633 = vmul.f32 %v1625, %v174
    %v1634 = vmul.f32 %v1621, %v178
    %v1635 = vmul.f32 %v1617, %v182
    %v1636 = vmul.f32 %v1629, %v186
    %v1637 = vmul.f32 %v1626, %v174
    %v1638 = vmul.f32 %v1622, %v178
    %v1639 = vmul.f32 %v1618, %v182
    %v1640 = vmul.f32 %v1630, %v186
    %v1641 = vmul.f32 %v1627, %v174
    %v1642 = vmul.f32 %v1623, %v178
    %v1643 = vmul.f32 %v1619, %v182
    %v1644 = vmul.f32 %v1631, %v186
    %v1645 = vmul.f32 %v1628, %v174
    %v1646 = vmul.f32 %v1624, %v178
    %v1647 = vmul.f32 %v1620, %v182
    %v1648 = vmul.f32 %v1632, %v186
    %1649 = vrot.lane.b32.xlu0 %v1505, 1
    %v1650 = vpop.permute.xlu0 %1649
    %1651 = vrot.lane.b32.xlu0 %v1509, 1
    %v1652 = vpop.permute.xlu0 %1651
    %1653 = vrot.lane.b32.xlu0 %v1513, 1
    %v1654 = vpop.permute.xlu0 %1653
    %1655 = vrot.lane.b32.xlu0 %v1517, 1
    %v1656 = vpop.permute.xlu0 %1655
    %1657 = vrot.lane.b32.xlu0 %v1506, 1
    %v1658 = vpop.permute.xlu0 %1657
    %1659 = vrot.lane.b32.xlu0 %v1510, 1
    %v1660 = vpop.permute.xlu0 %1659
    %1661 = vrot.lane.b32.xlu0 %v1514, 1
    %v1662 = vpop.permute.xlu0 %1661
    %1663 = vrot.lane.b32.xlu0 %v1518, 1
    %v1664 = vpop.permute.xlu0 %1663
    %1665 = vrot.lane.b32.xlu0 %v1507, 1
    %v1666 = vpop.permute.xlu0 %1665
    %1667 = vrot.lane.b32.xlu0 %v1511, 1
    %v1668 = vpop.permute.xlu0 %1667
    %1669 = vrot.lane.b32.xlu0 %v1515, 1
    %v1670 = vpop.permute.xlu0 %1669
    %1671 = vrot.lane.b32.xlu0 %v1519, 1
    %v1672 = vpop.permute.xlu0 %1671
    %1673 = vrot.lane.b32.xlu0 %v1508, 1
    %v1674 = vpop.permute.xlu0 %1673
    %1675 = vrot.lane.b32.xlu0 %v1512, 1
    %v1676 = vpop.permute.xlu0 %1675
    %1677 = vrot.lane.b32.xlu0 %v1516, 1
    %v1678 = vpop.permute.xlu0 %1677
    %1679 = vrot.lane.b32.xlu0 %v1520, 1
    %v1680 = vpop.permute.xlu0 %1679
    %v1681 = vsel %vm199, %v1666, %v1674
    %v1682 = vsel %vm199, %v1668, %v1676
    %v1683 = vsel %vm199, %v1670, %v1678
    %v1684 = vsel %vm199, %v1672, %v1680
    %v1685 = vsel %vm199, %v1658, %v1666
    %v1686 = vsel %vm199, %v1660, %v1668
    %v1687 = vsel %vm199, %v1662, %v1670
    %v1688 = vsel %vm199, %v1664, %v1672
    %v1689 = vsel %vm199, %v1650, %v1658
    %v1690 = vsel %vm199, %v1652, %v1660
    %v1691 = vsel %vm199, %v1654, %v1662
    %v1692 = vsel %vm199, %v1656, %v1664
    %v1693 = vsel %vm199, %v1674, %v1650
    %v1694 = vsel %vm199, %v1676, %v1652
    %v1695 = vsel %vm199, %v1678, %v1654
    %v1696 = vsel %vm199, %v1680, %v1656
    %v1697 = vmul.f32 %v1693, %v227
    %v1698 = vmul.f32 %v1689, %v231
    %v1699 = vmul.f32 %v1685, %v235
    %v1700 = vmul.f32 %v1681, %v239
    %v1701 = vmul.f32 %v1694, %v227
    %v1702 = vmul.f32 %v1690, %v231
    %v1703 = vmul.f32 %v1686, %v235
    %v1704 = vmul.f32 %v1682, %v239
    %v1705 = vmul.f32 %v1695, %v227
    %v1706 = vmul.f32 %v1691, %v231
    %v1707 = vmul.f32 %v1687, %v235
    %v1708 = vmul.f32 %v1683, %v239
    %v1709 = vmul.f32 %v1696, %v227
    %v1710 = vmul.f32 %v1692, %v231
    %v1711 = vmul.f32 %v1688, %v235
    %v1712 = vmul.f32 %v1684, %v239
    %1713 = vrot.lane.b32.xlu0 %v1505, 127
    %v1714 = vpop.permute.xlu0 %1713
    %1715 = vrot.lane.b32.xlu0 %v1509, 127
    %v1716 = vpop.permute.xlu0 %1715
    %1717 = vrot.lane.b32.xlu0 %v1513, 127
    %v1718 = vpop.permute.xlu0 %1717
    %1719 = vrot.lane.b32.xlu0 %v1517, 127
    %v1720 = vpop.permute.xlu0 %1719
    %1721 = vrot.lane.b32.xlu0 %v1506, 127
    %v1722 = vpop.permute.xlu0 %1721
    %1723 = vrot.lane.b32.xlu0 %v1510, 127
    %v1724 = vpop.permute.xlu0 %1723
    %1725 = vrot.lane.b32.xlu0 %v1514, 127
    %v1726 = vpop.permute.xlu0 %1725
    %1727 = vrot.lane.b32.xlu0 %v1518, 127
    %v1728 = vpop.permute.xlu0 %1727
    %1729 = vrot.lane.b32.xlu0 %v1507, 127
    %v1730 = vpop.permute.xlu0 %1729
    %1731 = vrot.lane.b32.xlu0 %v1511, 127
    %v1732 = vpop.permute.xlu0 %1731
    %1733 = vrot.lane.b32.xlu0 %v1515, 127
    %v1734 = vpop.permute.xlu0 %1733
    %1735 = vrot.lane.b32.xlu0 %v1519, 127
    %v1736 = vpop.permute.xlu0 %1735
    %1737 = vrot.lane.b32.xlu0 %v1508, 127
    %v1738 = vpop.permute.xlu0 %1737
    %1739 = vrot.lane.b32.xlu0 %v1512, 127
    %v1740 = vpop.permute.xlu0 %1739
    %1741 = vrot.lane.b32.xlu0 %v1516, 127
    %v1742 = vpop.permute.xlu0 %1741
    %1743 = vrot.lane.b32.xlu0 %v1520, 127
    %v1744 = vpop.permute.xlu0 %1743
    %v1745 = vsel %vm252, %v1730, %v1738
    %v1746 = vsel %vm252, %v1732, %v1740
    %v1747 = vsel %vm252, %v1734, %v1742
    %v1748 = vsel %vm252, %v1736, %v1744
    %v1749 = vsel %vm252, %v1722, %v1730
    %v1750 = vsel %vm252, %v1724, %v1732
    %v1751 = vsel %vm252, %v1726, %v1734
    %v1752 = vsel %vm252, %v1728, %v1736
    %v1753 = vsel %vm252, %v1714, %v1722
    %v1754 = vsel %vm252, %v1716, %v1724
    %v1755 = vsel %vm252, %v1718, %v1726
    %v1756 = vsel %vm252, %v1720, %v1728
    %v1757 = vsel %vm252, %v1738, %v1714
    %v1758 = vsel %vm252, %v1740, %v1716
    %v1759 = vsel %vm252, %v1742, %v1718
    %v1760 = vsel %vm252, %v1744, %v1720
    %v1761 = vmul.f32 %v1753, %v280
    %v1762 = vmul.f32 %v1749, %v284
    %v1763 = vmul.f32 %v1745, %v288
    %v1764 = vmul.f32 %v1757, %v292
    %v1765 = vmul.f32 %v1754, %v280
    %v1766 = vmul.f32 %v1750, %v284
    %v1767 = vmul.f32 %v1746, %v288
    %v1768 = vmul.f32 %v1758, %v292
    %v1769 = vmul.f32 %v1755, %v280
    %v1770 = vmul.f32 %v1751, %v284
    %v1771 = vmul.f32 %v1747, %v288
    %v1772 = vmul.f32 %v1759, %v292
    %v1773 = vmul.f32 %v1756, %v280
    %v1774 = vmul.f32 %v1752, %v284
    %v1775 = vmul.f32 %v1748, %v288
    %v1776 = vmul.f32 %v1760, %v292
    %v1777 = vld [vmem:[#allocation6] sm:$0x3f]
    %v1778 = vld [vmem:[#allocation6 + $0x8] sm:$0x3f]
    %v1779 = vld [vmem:[%s9] sm:$0x3f]
    %1781 = vset.pattern.permute.xlu0 0
    %1782 = vperm.xlu0 %1781, %v1779
    %v1783 = vpop.permute.xlu0 %1782
    %v1786 = vsel %vm820, %v1778, 0
    %1788 = vmatprep.subr.mxu0 %v1710
    %1789 = vmatpush1.msra.mxu0 %v1709
    %1790 = vmatprep.subr.mxu0 %v1706
    %1791 = vmatpush1.msra.mxu0 %v1705
    %1792 = vmatprep.subr.mxu0 %v1702
    %1793 = vmatpush1.msra.mxu0 %v1701
    %1794 = vmatprep.subr.mxu0 %v1698
    %1795 = vmatpush1.msra.mxu0 %v1697
    %1796 = vmatprep.subr.mxu0 %v1646
    %1797 = vmatpush1.msra.mxu0 %v1645
    %1798 = vmatprep.subr.mxu0 %v1642
    %1799 = vmatpush1.msra.mxu0 %v1641
    %1800 = vmatprep.subr.mxu0 %v1638
    %1801 = vmatpush1.msra.mxu0 %v1637
    %1802 = vmatprep.subr.mxu0 %v1634
    %1803 = vmatpush1.msra.mxu0 %v1633
    %1804 = vmatprep.subr.mxu0 %v1582
    %1805 = vmatpush1.msra.mxu0 %v1581
    %1806 = vmatprep.subr.mxu0 %v1578
    %1807 = vmatpush1.msra.mxu0 %v1577
    %1808 = vmatprep.subr.mxu0 %v1574
    %1809 = vmatpush1.msra.mxu0 %v1573
    %1810 = vmatprep.subr.mxu0 %v1570
    %1811 = vmatpush1.msra.mxu0 %v1569
    %1812 = vmatprep.subr.mxu0 %v1518
    %1813 = vmatpush1.msra.mxu0 %v1517
    %1814 = vmatprep.subr.mxu0 %v1514
    %1815 = vmatpush1.msra.mxu0 %v1513
    %1816 = vmatprep.subr.mxu0 %v1510
    %1817 = vmatpush1.msra.mxu0 %v1509
    %1818 = vmatprep.subr.mxu0 %v1506
    %1819 = vmatpush1.msra.mxu0 %v1505
    %1820 = vmatprep.subr.mxu0 0.0
    %1821 = vmatpush2.msra.mxu0 0.0
    %1822 = vmatprep.subr.mxu0 0.0
    %1823 = vmatpush2.msra.mxu0 0.0
    %1824 = vmatprep.subr.mxu0 0.0
    %1825 = vmatpush2.msra.mxu0 0.0
    %1826 = vmatprep.subr.mxu0 0.0
    %1827 = vmatpush2.msra.mxu0 0.0
    %1828 = vmatprep.subr.mxu0 0.0
    %1829 = vmatpush2.msra.mxu0 0.0
    %1830 = vmatprep.subr.mxu0 0.0
    %1831 = vmatpush2.msra.mxu0 0.0
    %1832 = vmatprep.subr.mxu0 0.0
    %1833 = vmatpush2.msra.mxu0 0.0
    %1834 = vmatprep.subr.mxu0 0.0
    %1835 = vmatpush2.msra.mxu0 0.0
    %1836 = vmatprep.subr.mxu0 0.0
    %1837 = vmatpush2.msra.mxu0 0.0
    %1838 = vmatprep.subr.mxu0 0.0
    %1839 = vmatpush2.msra.mxu0 0.0
    %1840 = vmatprep.subr.mxu0 0.0
    %1841 = vmatpush2.msra.mxu0 0.0
    %1842 = vmatprep.subr.mxu0 0.0
    %1843 = vmatpush2.msra.mxu0 0.0
    %1844 = vmatprep.subr.mxu0 %v1774
    %1845 = vmatpush2.msra.mxu0 %v1773
    %1846 = vmatprep.subr.mxu0 %v1770
    %1847 = vmatpush2.msra.mxu0 %v1769
    %1848 = vmatprep.subr.mxu0 %v1766
    %1849 = vmatpush2.msra.mxu0 %v1765
    %1850 = vmatprep.subr.mxu0 %v1762
    %1851 = vmatpush2.msra.mxu0 %v1761
    %1852 = vmatprep.mubr.f32.mxu0 %v1786
    %1853 = vmatmul.mubr.f32.gmra.mxu0 %v1777
    %v1854 = vpop.f32.mrf.mxu0
    %v1855 = vadd.f32 %v1783, %v1854
    %v1856 = vpop.f32.mrf.mxu0
    %v1857 = vadd.f32 %v1783, %v1856
    %1858 = vdwg.mxu0
    %1859 = vmatprep.subr.mxu0 %v1712
    %1860 = vmatpush1.msra.mxu0 %v1711
    %1861 = vmatprep.subr.mxu0 %v1708
    %1862 = vmatpush1.msra.mxu0 %v1707
    %1863 = vmatprep.subr.mxu0 %v1704
    %1864 = vmatpush1.msra.mxu0 %v1703
    %1865 = vmatprep.subr.mxu0 %v1700
    %1866 = vmatpush1.msra.mxu0 %v1699
    %1867 = vmatprep.subr.mxu0 %v1648
    %1868 = vmatpush1.msra.mxu0 %v1647
    %1869 = vmatprep.subr.mxu0 %v1644
    %1870 = vmatpush1.msra.mxu0 %v1643
    %1871 = vmatprep.subr.mxu0 %v1640
    %1872 = vmatpush1.msra.mxu0 %v1639
    %1873 = vmatprep.subr.mxu0 %v1636
    %1874 = vmatpush1.msra.mxu0 %v1635
    %1875 = vmatprep.subr.mxu0 %v1584
    %1876 = vmatpush1.msra.mxu0 %v1583
    %1877 = vmatprep.subr.mxu0 %v1580
    %1878 = vmatpush1.msra.mxu0 %v1579
    %1879 = vmatprep.subr.mxu0 %v1576
    %1880 = vmatpush1.msra.mxu0 %v1575
    %1881 = vmatprep.subr.mxu0 %v1572
    %1882 = vmatpush1.msra.mxu0 %v1571
    %1883 = vmatprep.subr.mxu0 %v1520
    %1884 = vmatpush1.msra.mxu0 %v1519
    %1885 = vmatprep.subr.mxu0 %v1516
    %1886 = vmatpush1.msra.mxu0 %v1515
    %1887 = vmatprep.subr.mxu0 %v1512
    %1888 = vmatpush1.msra.mxu0 %v1511
    %1889 = vmatprep.subr.mxu0 %v1508
    %1890 = vmatpush1.msra.mxu0 %v1507
    %1891 = vmatprep.subr.mxu0 0.0
    %1892 = vmatpush2.msra.mxu0 0.0
    %1893 = vmatprep.subr.mxu0 0.0
    %1894 = vmatpush2.msra.mxu0 0.0
    %1895 = vmatprep.subr.mxu0 0.0
    %1896 = vmatpush2.msra.mxu0 0.0
    %1897 = vmatprep.subr.mxu0 0.0
    %1898 = vmatpush2.msra.mxu0 0.0
    %1899 = vmatprep.subr.mxu0 0.0
    %1900 = vmatpush2.msra.mxu0 0.0
    %1901 = vmatprep.subr.mxu0 0.0
    %1902 = vmatpush2.msra.mxu0 0.0
    %1903 = vmatprep.subr.mxu0 0.0
    %1904 = vmatpush2.msra.mxu0 0.0
    %1905 = vmatprep.subr.mxu0 0.0
    %1906 = vmatpush2.msra.mxu0 0.0
    %1907 = vmatprep.subr.mxu0 0.0
    %1908 = vmatpush2.msra.mxu0 0.0
    %1909 = vmatprep.subr.mxu0 0.0
    %1910 = vmatpush2.msra.mxu0 0.0
    %1911 = vmatprep.subr.mxu0 0.0
    %1912 = vmatpush2.msra.mxu0 0.0
    %1913 = vmatprep.subr.mxu0 0.0
    %1914 = vmatpush2.msra.mxu0 0.0
    %1915 = vmatprep.subr.mxu0 %v1776
    %1916 = vmatpush2.msra.mxu0 %v1775
    %1917 = vmatprep.subr.mxu0 %v1772
    %1918 = vmatpush2.msra.mxu0 %v1771
    %1919 = vmatprep.subr.mxu0 %v1768
    %1920 = vmatpush2.msra.mxu0 %v1767
    %1921 = vmatprep.subr.mxu0 %v1764
    %1922 = vmatpush2.msra.mxu0 %v1763
    %1923 = vmatprep.mubr.f32.mxu0 %v1786
    %1924 = vmatmul.mubr.f32.gmra.mxu0 %v1777
    %v1925 = vpop.f32.mrf.mxu0
    %v1926 = vadd.f32 %v1783, %v1925
    %v1927 = vpop.f32.mrf.mxu0
    %v1928 = vadd.f32 %v1783, %v1927
    %1929 = vdwg.mxu0
    %1930 = vst [vmem:[%s10] sm:$0x3f] %v1855
    %1931 = vst [vmem:[%s10 + $0x8] sm:$0x3f] %v1857
    %s1932 = scalar_lea.vmem %s10, 16
    %1933 = vst [vmem:[%s1932] sm:$0x3f] %v1926
    %1934 = vst [vmem:[%s1932 + $0x8] sm:$0x3f] %v1928
    // Predicated region
    $region54: #{tpu_custom_call.1} parent=1 // pred_check
      _
    $region55: #{tpu_custom_call.1} parent=1 // pred_check_branch
      %1936 = sbr.rel (0) target = $region57
    $region56: #{tpu_custom_call.1} parent=1 // pred_region
      _
    $region57: #{tpu_custom_call.1} parent=1 // pred_fallthru
      _
    // Predicated region
    $region58: #{tpu_custom_call.1} parent=1 // pred_check
      _
    $region59: #{tpu_custom_call.1} parent=1 // pred_check_branch
      %1938 = sbr.rel (0) target = $region61
    $region60: #{tpu_custom_call.1} parent=1 // pred_region
      _
    $region61: #{tpu_custom_call.1} parent=1 // pred_fallthru
      _
    %1939 = vsyncpa [#allocation3], 1
    %1940 = vsyncpa [#allocation5], 1

</llo_original>
